<compile_context>
chip_gen: v7x
topology: tpu7x:2x2x1
jax: 0.10.0
libtpu: 0.0.40
codegen_flags: <defaults>
</compile_context>

<pallas_src>
import jax
import jax.numpy as jnp
from jax.experimental import pallas as pl
from jax.experimental.pallas import tpu as pltpu


def _layernorm(v, eps=1e-5):
    mu = jnp.mean(v, axis=-1, keepdims=True)
    var = jnp.mean((v - mu) ** 2, axis=-1, keepdims=True)
    return (v - mu) * jax.lax.rsqrt(var + eps)


def _sa_block_kernel(x_ref,
                     wq_ref, bq_ref, wk_ref, bk_ref, wv_ref, bv_ref,
                     woh_ref, bo_ref, w1_ref, b1_ref, w2_ref, b2_ref,
                     o_ref):
    Bt, S, D = x_ref.shape
    H, dk, _ = woh_ref.shape          # wo pre-split per head: (H, dk, D)
    N = Bt * S

    # Flatten the batch-of-sequences into one (N, D) matrix: every projection
    # and the FFN become a single large MXU matmul.
    x = x_ref[...].astype(jnp.float32).reshape(N, D)

    # ---- Multi-head self-attention on LayerNorm(x) ----
    xn = _layernorm(x).astype(jnp.bfloat16)

    def proj(w_ref, b_ref):
        out = jnp.dot(xn, w_ref[...], preferred_element_type=jnp.float32)
        return (out + b_ref[...]).astype(jnp.bfloat16).reshape(Bt, S, D)

    q = proj(wq_ref, bq_ref)          # (Bt, S, D) bf16
    k = proj(wk_ref, bk_ref)
    v = proj(wv_ref, bv_ref)

    wo_heads = woh_ref[...]           # (H, dk, D) bf16
    scale = 1.0 / float(dk) ** 0.5

    att = jnp.zeros((N, D), jnp.float32)
    for h in range(H):                # static unroll; no concat, recombination via wo
        sl = slice(h * dk, (h + 1) * dk)
        qh, kh, vh = q[:, :, sl], k[:, :, sl], v[:, :, sl]      # (Bt, S, dk)
        s = jnp.einsum('bqd,bkd->bqk', qh, kh,
                       preferred_element_type=jnp.float32) * scale
        s = s - jnp.max(s, axis=-1, keepdims=True)
        p = jnp.exp(s)
        p = p * pl.reciprocal(jnp.sum(p, axis=-1, keepdims=True), approx=True)
        oh = jnp.einsum('bqk,bkd->bqd', p.astype(jnp.bfloat16), vh,
                        preferred_element_type=jnp.float32)     # (Bt, S, dk)
        att = att + jnp.dot(oh.reshape(N, dk).astype(jnp.bfloat16),
                            wo_heads[h],
                            preferred_element_type=jnp.float32)

    x1 = x + att + bo_ref[...]

    # ---- Position-wise feed-forward on LayerNorm(x1) ----
    x1n = _layernorm(x1).astype(jnp.bfloat16)
    h1 = jnp.dot(x1n, w1_ref[...], preferred_element_type=jnp.float32) + b1_ref[...]
    h1 = jnp.maximum(h1, 0.0).astype(jnp.bfloat16)
    ff = jnp.dot(h1, w2_ref[...], preferred_element_type=jnp.float32) + b2_ref[...]

    o_ref[...] = (x1 + ff).reshape(Bt, S, D).astype(o_ref.dtype)


def _pick_block_batch(B, max_block=8):
    """Largest divisor of B (<= max_block) that still leaves >= 2 grid steps
    when B >= 2 (so both v7x TensorCores get work)."""
    best = 1
    for bt in range(1, min(B, max_block) + 1):
        if B % bt == 0 and (B == 1 or B // bt >= 2):
            best = bt
    return best


def self_attention_block(x, params, num_heads):
    """x: (B, S, D) float32. params: weight matrices stored (in, out), biases (1, out)."""
    B, S, D = x.shape
    assert D % num_heads == 0, "c_in must be divisible by num_heads"
    dk = D // num_heads
    d_ff = params["w1"].shape[1]
    # NOTE: no attention mask (matches the module, which passes mask=None).

    Bt = _pick_block_batch(B)
    grid = (B // Bt,)

    bf16 = jnp.bfloat16
    # bf16 weights (native MXU path, half the HBM/VMEM bytes); biases stay f32
    # and are added to the f32 accumulators.
    wq = params["wq"].astype(bf16)
    wk = params["wk"].astype(bf16)
    wv = params["wv"].astype(bf16)
    # Pre-split the output projection per head so the kernel never slices wo
    # nor concatenates head outputs: att = sum_h o_h @ wo_heads[h].
    wo_heads = params["wo"].reshape(num_heads, dk, D).astype(bf16)
    w1 = params["w1"].astype(bf16)
    w2 = params["w2"].astype(bf16)

    def full(shape):
        return pl.BlockSpec(shape, lambda i: (0,) * len(shape))

    in_specs = [
        pl.BlockSpec((Bt, S, D), lambda i: (i, 0, 0)),   # x block (Bt batch rows)
        full((D, D)), full((1, D)),                      # wq, bq
        full((D, D)), full((1, D)),                      # wk, bk
        full((D, D)), full((1, D)),                      # wv, bv
        full((num_heads, dk, D)), full((1, D)),          # wo (per-head), bo
        full((D, d_ff)), full((1, d_ff)),                # w1, b1
        full((d_ff, D)), full((1, D)),                   # w2, b2
    ]

    return pl.pallas_call(
        _sa_block_kernel,
        out_shape=jax.ShapeDtypeStruct((B, S, D), x.dtype),
        grid_spec=pltpu.PrefetchScalarGridSpec(
            num_scalar_prefetch=0,
            grid=grid,
            in_specs=in_specs,
            out_specs=pl.BlockSpec((Bt, S, D), lambda i: (i, 0, 0)),
        ),
        compiler_params=pltpu.CompilerParams(
            dimension_semantics=("parallel",),
            vmem_limit_bytes=32 * 1024 * 1024,
        ),
    )(x, wq, params["bq"], wk, params["bk"], wv, params["bv"],
      wo_heads, params["bo"], w1, params["b1"], w2, params["b2"])


def _reference(x, p, num_heads):
    """Pure-JAX f32 reference mirroring the PyTorch forward (eval mode)."""
    B, S, D = x.shape
    dk = D // num_heads
    xn = _layernorm(x)
    q = xn @ p["wq"] + p["bq"]
    k = xn @ p["wk"] + p["bk"]
    v = xn @ p["wv"] + p["bv"]
    qh = q.reshape(B, S, num_heads, dk).transpose(0, 2, 1, 3)
    kh = k.reshape(B, S, num_heads, dk).transpose(0, 2, 1, 3)
    vh = v.reshape(B, S, num_heads, dk).transpose(0, 2, 1, 3)
    scores = jnp.einsum("bhqd,bhkd->bhqk", qh, kh) / jnp.sqrt(jnp.float32(dk))
    attn = jax.nn.softmax(scores, axis=-1)
    o = jnp.einsum("bhqk,bhkd->bhqd", attn, vh)
    o = o.transpose(0, 2, 1, 3).reshape(B, S, D)
    att_out = o @ p["wo"] + p["bo"]
    x1 = x + att_out
    x1n = _layernorm(x1)
    ff = jnp.maximum(x1n @ p["w1"] + p["b1"], 0.0) @ p["w2"] + p["b2"]
    return x1 + ff


def make_params(key, D, num_heads):
    d_ff = 4 * D
    keys = jax.random.split(key, 12)
    scale = 0.1

    def w(k, shape):
        return (scale * jax.random.normal(k, shape)).astype(jnp.float32)

    # Weights stored as (in, out) so the kernel computes x @ W + b
    # (equivalent to PyTorch's x @ W_pt^T + b).
    return {
        "wq": w(keys[0], (D, D)),  "bq": w(keys[1], (1, D)),
        "wk": w(keys[2], (D, D)),  "bk": w(keys[3], (1, D)),
        "wv": w(keys[4], (D, D)),  "bv": w(keys[5], (1, D)),
        "wo": w(keys[6], (D, D)),  "bo": w(keys[7], (1, D)),
        "w1": w(keys[8], (D, d_ff)), "b1": w(keys[9], (1, d_ff)),
        "w2": w(keys[10], (d_ff, D)), "b2": w(keys[11], (1, D)),
    }


if __name__ == "__main__":
    B, S, D, H = 4, 16, 32, 4   # c_in = 32, num_heads = 4, d_k = 8
    key = jax.random.PRNGKey(0)
    kx, kp = jax.random.split(key)
    x = jax.random.normal(kx, (B, S, D), dtype=jnp.float32)
    params = make_params(kp, D, H)

    out = self_attention_block(x, params, num_heads=H)
    out = jax.block_until_ready(out)

    ref = jax.block_until_ready(_reference(x, params, H))
    assert out.shape == (B, S, D)
    # bf16 matmul path vs. f32 reference -> relaxed tolerance.
    assert jnp.allclose(out, ref, atol=5e-2, rtol=5e-2), \
        f"max abs err {jnp.max(jnp.abs(out - ref))}"

    print("KERNEL_OK")
</pallas_src>

<mosaic_0001>
module attributes {stable_mosaic.version = 11 : i64} {
  func.func @_sa_block_kernel(%arg0: i32, %arg1: memref<2x16x32xf32, #tpu.memory_space<vmem>>, %arg2: memref<32x32xbf16, #tpu.memory_space<vmem>>, %arg3: memref<1x32xf32, #tpu.memory_space<vmem>>, %arg4: memref<32x32xbf16, #tpu.memory_space<vmem>>, %arg5: memref<1x32xf32, #tpu.memory_space<vmem>>, %arg6: memref<32x32xbf16, #tpu.memory_space<vmem>>, %arg7: memref<1x32xf32, #tpu.memory_space<vmem>>, %arg8: memref<4x8x32xbf16, #tpu.memory_space<vmem>>, %arg9: memref<1x32xf32, #tpu.memory_space<vmem>>, %arg10: memref<32x128xbf16, #tpu.memory_space<vmem>>, %arg11: memref<1x128xf32, #tpu.memory_space<vmem>>, %arg12: memref<128x32xbf16, #tpu.memory_space<vmem>>, %arg13: memref<1x32xf32, #tpu.memory_space<vmem>>, %arg14: memref<2x16x32xf32, #tpu.memory_space<vmem>>) attributes {dimension_semantics = [#tpu.dimension_semantics<parallel>], iteration_bounds = array<i64: 2>, scalar_prefetch = 0 : i64, scratch_operands = 0 : i64, tpu.core_type = #tpu.core_type<tc>, window_params = [{transform_indices = @transform_0, window_bounds = array<i64: 2, 16, 32>}, {pipeline_mode = #tpu.pipeline_mode<synchronous>, transform_indices = @transform_1, window_bounds = array<i64: 32, 32>}, {pipeline_mode = #tpu.pipeline_mode<synchronous>, transform_indices = @transform_2, window_bounds = array<i64: 1, 32>}, {pipeline_mode = #tpu.pipeline_mode<synchronous>, transform_indices = @transform_3, window_bounds = array<i64: 32, 32>}, {pipeline_mode = #tpu.pipeline_mode<synchronous>, transform_indices = @transform_4, window_bounds = array<i64: 1, 32>}, {pipeline_mode = #tpu.pipeline_mode<synchronous>, transform_indices = @transform_5, window_bounds = array<i64: 32, 32>}, {pipeline_mode = #tpu.pipeline_mode<synchronous>, transform_indices = @transform_6, window_bounds = array<i64: 1, 32>}, {pipeline_mode = #tpu.pipeline_mode<synchronous>, transform_indices = @transform_7, window_bounds = array<i64: 4, 8, 32>}, {pipeline_mode = #tpu.pipeline_mode<synchronous>, transform_indices = @transform_8, window_bounds = array<i64: 1, 32>}, {pipeline_mode = #tpu.pipeline_mode<synchronous>, transform_indices = @transform_9, window_bounds = array<i64: 32, 128>}, {pipeline_mode = #tpu.pipeline_mode<synchronous>, transform_indices = @transform_10, window_bounds = array<i64: 1, 128>}, {pipeline_mode = #tpu.pipeline_mode<synchronous>, transform_indices = @transform_11, window_bounds = array<i64: 128, 32>}, {pipeline_mode = #tpu.pipeline_mode<synchronous>, transform_indices = @transform_12, window_bounds = array<i64: 1, 32>}, {transform_indices = @transform_13, window_bounds = array<i64: 2, 16, 32>}]} {
    %c0 = arith.constant 0 : index
    %c0_0 = arith.constant 0 : index
    %c0_1 = arith.constant 0 : index
    %0 = vector.load %arg1[%c0, %c0_0, %c0_1] : memref<2x16x32xf32, #tpu.memory_space<vmem>>, vector<2x16x32xf32>
    %1 = vector.shape_cast %0 : vector<2x16x32xf32> to vector<32x32xf32>
    %cst = arith.constant dense<0.000000e+00> : vector<32xf32>
    %2 = vector.multi_reduction <add>, %1, %cst [1] : vector<32x32xf32> to vector<32xf32>
    %3 = vector.shape_cast %2 : vector<32xf32> to vector<32x1xf32>
    %cst_2 = arith.constant 3.200000e+01 : f32
    %4 = vector.broadcast %cst_2 : f32 to vector<32x1xf32>
    %5 = arith.divf %3, %4 : vector<32x1xf32>
    %6 = vector.broadcast %5 : vector<32x1xf32> to vector<32x32xf32>
    %7 = arith.subf %1, %6 : vector<32x32xf32>
    %8 = arith.mulf %7, %7 : vector<32x32xf32>
    %cst_3 = arith.constant dense<0.000000e+00> : vector<32xf32>
    %9 = vector.multi_reduction <add>, %8, %cst_3 [1] : vector<32x32xf32> to vector<32xf32>
    %10 = vector.shape_cast %9 : vector<32xf32> to vector<32x1xf32>
    %cst_4 = arith.constant 3.200000e+01 : f32
    %11 = vector.broadcast %cst_4 : f32 to vector<32x1xf32>
    %12 = arith.divf %10, %11 : vector<32x1xf32>
    %13 = vector.broadcast %5 : vector<32x1xf32> to vector<32x32xf32>
    %14 = arith.subf %1, %13 : vector<32x32xf32>
    %cst_5 = arith.constant 9.99999974E-6 : f32
    %15 = vector.broadcast %cst_5 : f32 to vector<32x1xf32>
    %16 = arith.addf %12, %15 : vector<32x1xf32>
    %17 = math.rsqrt %16 : vector<32x1xf32>
    %18 = vector.broadcast %17 : vector<32x1xf32> to vector<32x32xf32>
    %19 = arith.mulf %14, %18 : vector<32x32xf32>
    %20 = arith.truncf %19 : vector<32x32xf32> to vector<32x32xbf16>
    %c0_6 = arith.constant 0 : index
    %c0_7 = arith.constant 0 : index
    %21 = vector.load %arg2[%c0_6, %c0_7] : memref<32x32xbf16, #tpu.memory_space<vmem>>, vector<32x32xbf16>
    %cst_8 = arith.constant dense<0.000000e+00> : vector<32x32xf32>
    %22 = tpu.matmul %20, %21, %cst_8 {dimension_numbers = #tpu.dot_dimension_numbers<[1], [0], [0], [1], [0, 0, 1, 1], [], []>} : vector<32x32xbf16>, vector<32x32xbf16>, vector<32x32xf32> -> vector<32x32xf32>
    %c0_9 = arith.constant 0 : index
    %c0_10 = arith.constant 0 : index
    %23 = vector.load %arg3[%c0_9, %c0_10] : memref<1x32xf32, #tpu.memory_space<vmem>>, vector<1x32xf32>
    %24 = vector.broadcast %23 : vector<1x32xf32> to vector<32x32xf32>
    %25 = arith.addf %22, %24 : vector<32x32xf32>
    %26 = arith.truncf %25 : vector<32x32xf32> to vector<32x32xbf16>
    %27 = vector.shape_cast %26 : vector<32x32xbf16> to vector<2x16x32xbf16>
    %c0_11 = arith.constant 0 : index
    %c0_12 = arith.constant 0 : index
    %28 = vector.load %arg4[%c0_11, %c0_12] : memref<32x32xbf16, #tpu.memory_space<vmem>>, vector<32x32xbf16>
    %cst_13 = arith.constant dense<0.000000e+00> : vector<32x32xf32>
    %29 = tpu.matmul %20, %28, %cst_13 {dimension_numbers = #tpu.dot_dimension_numbers<[1], [0], [0], [1], [0, 0, 1, 1], [], []>} : vector<32x32xbf16>, vector<32x32xbf16>, vector<32x32xf32> -> vector<32x32xf32>
    %c0_14 = arith.constant 0 : index
    %c0_15 = arith.constant 0 : index
    %30 = vector.load %arg5[%c0_14, %c0_15] : memref<1x32xf32, #tpu.memory_space<vmem>>, vector<1x32xf32>
    %31 = vector.broadcast %30 : vector<1x32xf32> to vector<32x32xf32>
    %32 = arith.addf %29, %31 : vector<32x32xf32>
    %33 = arith.truncf %32 : vector<32x32xf32> to vector<32x32xbf16>
    %34 = vector.shape_cast %33 : vector<32x32xbf16> to vector<2x16x32xbf16>
    %c0_16 = arith.constant 0 : index
    %c0_17 = arith.constant 0 : index
    %35 = vector.load %arg6[%c0_16, %c0_17] : memref<32x32xbf16, #tpu.memory_space<vmem>>, vector<32x32xbf16>
    %cst_18 = arith.constant dense<0.000000e+00> : vector<32x32xf32>
    %36 = tpu.matmul %20, %35, %cst_18 {dimension_numbers = #tpu.dot_dimension_numbers<[1], [0], [0], [1], [0, 0, 1, 1], [], []>} : vector<32x32xbf16>, vector<32x32xbf16>, vector<32x32xf32> -> vector<32x32xf32>
    %c0_19 = arith.constant 0 : index
    %c0_20 = arith.constant 0 : index
    %37 = vector.load %arg7[%c0_19, %c0_20] : memref<1x32xf32, #tpu.memory_space<vmem>>, vector<1x32xf32>
    %38 = vector.broadcast %37 : vector<1x32xf32> to vector<32x32xf32>
    %39 = arith.addf %36, %38 : vector<32x32xf32>
    %40 = arith.truncf %39 : vector<32x32xf32> to vector<32x32xbf16>
    %41 = vector.shape_cast %40 : vector<32x32xbf16> to vector<2x16x32xbf16>
    %c0_21 = arith.constant 0 : index
    %c0_22 = arith.constant 0 : index
    %c0_23 = arith.constant 0 : index
    %42 = vector.load %arg8[%c0_21, %c0_22, %c0_23] : memref<4x8x32xbf16, #tpu.memory_space<vmem>>, vector<4x8x32xbf16>
    %cst_24 = arith.constant 0.000000e+00 : f32
    %43 = vector.broadcast %cst_24 : f32 to vector<32x32xf32>
    %44 = vector.extract_strided_slice %27 {offsets = [0, 0, 0], sizes = [2, 16, 8], strides = [1, 1, 1]} : vector<2x16x32xbf16> to vector<2x16x8xbf16>
    %45 = vector.extract_strided_slice %34 {offsets = [0, 0, 0], sizes = [2, 16, 8], strides = [1, 1, 1]} : vector<2x16x32xbf16> to vector<2x16x8xbf16>
    %46 = vector.extract_strided_slice %41 {offsets = [0, 0, 0], sizes = [2, 16, 8], strides = [1, 1, 1]} : vector<2x16x32xbf16> to vector<2x16x8xbf16>
    "tpu.trace_start"() <{level = 10 : i32, message = "bqd,bkd->bqk"}> : () -> ()
    %cst_25 = arith.constant dense<0.000000e+00> : vector<2x16x16xf32>
    %47 = tpu.matmul %44, %45, %cst_25 {dimension_numbers = #tpu.dot_dimension_numbers<[2], [2], [1], [1], [0, 0, 0, 1, 1, 1], [0], [0]>} : vector<2x16x8xbf16>, vector<2x16x8xbf16>, vector<2x16x16xf32> -> vector<2x16x16xf32>
    "tpu.trace_stop"() : () -> ()
    %cst_26 = arith.constant 0.353553385 : f32
    %48 = vector.broadcast %cst_26 : f32 to vector<2x16x16xf32>
    %49 = arith.mulf %47, %48 : vector<2x16x16xf32>
    %cst_27 = arith.constant dense<0xFF800000> : vector<2x16xf32>
    %50 = vector.multi_reduction <maximumf>, %49, %cst_27 [2] : vector<2x16x16xf32> to vector<2x16xf32>
    %51 = vector.shape_cast %50 : vector<2x16xf32> to vector<2x16x1xf32>
    %52 = vector.broadcast %51 : vector<2x16x1xf32> to vector<2x16x16xf32>
    %53 = arith.subf %49, %52 : vector<2x16x16xf32>
    %54 = math.exp %53 : vector<2x16x16xf32>
    %cst_28 = arith.constant dense<0.000000e+00> : vector<2x16xf32>
    %55 = vector.multi_reduction <add>, %54, %cst_28 [2] : vector<2x16x16xf32> to vector<2x16xf32>
    %56 = vector.shape_cast %55 : vector<2x16xf32> to vector<2x16x1xf32>
    %57 = tpu.reciprocal %56 {approx = true} : vector<2x16x1xf32> -> vector<2x16x1xf32>
    %58 = vector.broadcast %57 : vector<2x16x1xf32> to vector<2x16x16xf32>
    %59 = arith.mulf %54, %58 : vector<2x16x16xf32>
    %60 = arith.truncf %59 : vector<2x16x16xf32> to vector<2x16x16xbf16>
    "tpu.trace_start"() <{level = 10 : i32, message = "bqk,bkd->bqd"}> : () -> ()
    %cst_29 = arith.constant dense<0.000000e+00> : vector<2x16x8xf32>
    %61 = tpu.matmul %60, %46, %cst_29 {dimension_numbers = #tpu.dot_dimension_numbers<[2], [1], [1], [2], [0, 0, 0, 1, 1, 2], [0], [0]>} : vector<2x16x16xbf16>, vector<2x16x8xbf16>, vector<2x16x8xf32> -> vector<2x16x8xf32>
    "tpu.trace_stop"() : () -> ()
    %62 = vector.shape_cast %61 : vector<2x16x8xf32> to vector<32x8xf32>
    %63 = arith.truncf %62 : vector<32x8xf32> to vector<32x8xbf16>
    %64 = vector.extract_strided_slice %42 {offsets = [0, 0, 0], sizes = [1, 8, 32], strides = [1, 1, 1]} : vector<4x8x32xbf16> to vector<1x8x32xbf16>
    %65 = vector.shape_cast %64 : vector<1x8x32xbf16> to vector<8x32xbf16>
    %cst_30 = arith.constant dense<0.000000e+00> : vector<32x32xf32>
    %66 = tpu.matmul %63, %65, %cst_30 {dimension_numbers = #tpu.dot_dimension_numbers<[1], [0], [0], [1], [0, 0, 1, 1], [], []>} : vector<32x8xbf16>, vector<8x32xbf16>, vector<32x32xf32> -> vector<32x32xf32>
    %67 = arith.addf %43, %66 : vector<32x32xf32>
    %68 = vector.extract_strided_slice %27 {offsets = [0, 0, 8], sizes = [2, 16, 8], strides = [1, 1, 1]} : vector<2x16x32xbf16> to vector<2x16x8xbf16>
    %69 = vector.extract_strided_slice %34 {offsets = [0, 0, 8], sizes = [2, 16, 8], strides = [1, 1, 1]} : vector<2x16x32xbf16> to vector<2x16x8xbf16>
    %70 = vector.extract_strided_slice %41 {offsets = [0, 0, 8], sizes = [2, 16, 8], strides = [1, 1, 1]} : vector<2x16x32xbf16> to vector<2x16x8xbf16>
    "tpu.trace_start"() <{level = 10 : i32, message = "bqd,bkd->bqk"}> : () -> ()
    %cst_31 = arith.constant dense<0.000000e+00> : vector<2x16x16xf32>
    %71 = tpu.matmul %68, %69, %cst_31 {dimension_numbers = #tpu.dot_dimension_numbers<[2], [2], [1], [1], [0, 0, 0, 1, 1, 1], [0], [0]>} : vector<2x16x8xbf16>, vector<2x16x8xbf16>, vector<2x16x16xf32> -> vector<2x16x16xf32>
    "tpu.trace_stop"() : () -> ()
    %cst_32 = arith.constant 0.353553385 : f32
    %72 = vector.broadcast %cst_32 : f32 to vector<2x16x16xf32>
    %73 = arith.mulf %71, %72 : vector<2x16x16xf32>
    %cst_33 = arith.constant dense<0xFF800000> : vector<2x16xf32>
    %74 = vector.multi_reduction <maximumf>, %73, %cst_33 [2] : vector<2x16x16xf32> to vector<2x16xf32>
    %75 = vector.shape_cast %74 : vector<2x16xf32> to vector<2x16x1xf32>
    %76 = vector.broadcast %75 : vector<2x16x1xf32> to vector<2x16x16xf32>
    %77 = arith.subf %73, %76 : vector<2x16x16xf32>
    %78 = math.exp %77 : vector<2x16x16xf32>
    %cst_34 = arith.constant dense<0.000000e+00> : vector<2x16xf32>
    %79 = vector.multi_reduction <add>, %78, %cst_34 [2] : vector<2x16x16xf32> to vector<2x16xf32>
    %80 = vector.shape_cast %79 : vector<2x16xf32> to vector<2x16x1xf32>
    %81 = tpu.reciprocal %80 {approx = true} : vector<2x16x1xf32> -> vector<2x16x1xf32>
    %82 = vector.broadcast %81 : vector<2x16x1xf32> to vector<2x16x16xf32>
    %83 = arith.mulf %78, %82 : vector<2x16x16xf32>
    %84 = arith.truncf %83 : vector<2x16x16xf32> to vector<2x16x16xbf16>
    "tpu.trace_start"() <{level = 10 : i32, message = "bqk,bkd->bqd"}> : () -> ()
    %cst_35 = arith.constant dense<0.000000e+00> : vector<2x16x8xf32>
    %85 = tpu.matmul %84, %70, %cst_35 {dimension_numbers = #tpu.dot_dimension_numbers<[2], [1], [1], [2], [0, 0, 0, 1, 1, 2], [0], [0]>} : vector<2x16x16xbf16>, vector<2x16x8xbf16>, vector<2x16x8xf32> -> vector<2x16x8xf32>
    "tpu.trace_stop"() : () -> ()
    %86 = vector.shape_cast %85 : vector<2x16x8xf32> to vector<32x8xf32>
    %87 = arith.truncf %86 : vector<32x8xf32> to vector<32x8xbf16>
    %88 = vector.extract_strided_slice %42 {offsets = [1, 0, 0], sizes = [1, 8, 32], strides = [1, 1, 1]} : vector<4x8x32xbf16> to vector<1x8x32xbf16>
    %89 = vector.shape_cast %88 : vector<1x8x32xbf16> to vector<8x32xbf16>
    %cst_36 = arith.constant dense<0.000000e+00> : vector<32x32xf32>
    %90 = tpu.matmul %87, %89, %cst_36 {dimension_numbers = #tpu.dot_dimension_numbers<[1], [0], [0], [1], [0, 0, 1, 1], [], []>} : vector<32x8xbf16>, vector<8x32xbf16>, vector<32x32xf32> -> vector<32x32xf32>
    %91 = arith.addf %67, %90 : vector<32x32xf32>
    %92 = vector.extract_strided_slice %27 {offsets = [0, 0, 16], sizes = [2, 16, 8], strides = [1, 1, 1]} : vector<2x16x32xbf16> to vector<2x16x8xbf16>
    %93 = vector.extract_strided_slice %34 {offsets = [0, 0, 16], sizes = [2, 16, 8], strides = [1, 1, 1]} : vector<2x16x32xbf16> to vector<2x16x8xbf16>
    %94 = vector.extract_strided_slice %41 {offsets = [0, 0, 16], sizes = [2, 16, 8], strides = [1, 1, 1]} : vector<2x16x32xbf16> to vector<2x16x8xbf16>
    "tpu.trace_start"() <{level = 10 : i32, message = "bqd,bkd->bqk"}> : () -> ()
    %cst_37 = arith.constant dense<0.000000e+00> : vector<2x16x16xf32>
    %95 = tpu.matmul %92, %93, %cst_37 {dimension_numbers = #tpu.dot_dimension_numbers<[2], [2], [1], [1], [0, 0, 0, 1, 1, 1], [0], [0]>} : vector<2x16x8xbf16>, vector<2x16x8xbf16>, vector<2x16x16xf32> -> vector<2x16x16xf32>
    "tpu.trace_stop"() : () -> ()
    %cst_38 = arith.constant 0.353553385 : f32
    %96 = vector.broadcast %cst_38 : f32 to vector<2x16x16xf32>
    %97 = arith.mulf %95, %96 : vector<2x16x16xf32>
    %cst_39 = arith.constant dense<0xFF800000> : vector<2x16xf32>
    %98 = vector.multi_reduction <maximumf>, %97, %cst_39 [2] : vector<2x16x16xf32> to vector<2x16xf32>
    %99 = vector.shape_cast %98 : vector<2x16xf32> to vector<2x16x1xf32>
    %100 = vector.broadcast %99 : vector<2x16x1xf32> to vector<2x16x16xf32>
    %101 = arith.subf %97, %100 : vector<2x16x16xf32>
    %102 = math.exp %101 : vector<2x16x16xf32>
    %cst_40 = arith.constant dense<0.000000e+00> : vector<2x16xf32>
    %103 = vector.multi_reduction <add>, %102, %cst_40 [2] : vector<2x16x16xf32> to vector<2x16xf32>
    %104 = vector.shape_cast %103 : vector<2x16xf32> to vector<2x16x1xf32>
    %105 = tpu.reciprocal %104 {approx = true} : vector<2x16x1xf32> -> vector<2x16x1xf32>
    %106 = vector.broadcast %105 : vector<2x16x1xf32> to vector<2x16x16xf32>
    %107 = arith.mulf %102, %106 : vector<2x16x16xf32>
    %108 = arith.truncf %107 : vector<2x16x16xf32> to vector<2x16x16xbf16>
    "tpu.trace_start"() <{level = 10 : i32, message = "bqk,bkd->bqd"}> : () -> ()
    %cst_41 = arith.constant dense<0.000000e+00> : vector<2x16x8xf32>
    %109 = tpu.matmul %108, %94, %cst_41 {dimension_numbers = #tpu.dot_dimension_numbers<[2], [1], [1], [2], [0, 0, 0, 1, 1, 2], [0], [0]>} : vector<2x16x16xbf16>, vector<2x16x8xbf16>, vector<2x16x8xf32> -> vector<2x16x8xf32>
    "tpu.trace_stop"() : () -> ()
    %110 = vector.shape_cast %109 : vector<2x16x8xf32> to vector<32x8xf32>
    %111 = arith.truncf %110 : vector<32x8xf32> to vector<32x8xbf16>
    %112 = vector.extract_strided_slice %42 {offsets = [2, 0, 0], sizes = [1, 8, 32], strides = [1, 1, 1]} : vector<4x8x32xbf16> to vector<1x8x32xbf16>
    %113 = vector.shape_cast %112 : vector<1x8x32xbf16> to vector<8x32xbf16>
    %cst_42 = arith.constant dense<0.000000e+00> : vector<32x32xf32>
    %114 = tpu.matmul %111, %113, %cst_42 {dimension_numbers = #tpu.dot_dimension_numbers<[1], [0], [0], [1], [0, 0, 1, 1], [], []>} : vector<32x8xbf16>, vector<8x32xbf16>, vector<32x32xf32> -> vector<32x32xf32>
    %115 = arith.addf %91, %114 : vector<32x32xf32>
    %116 = vector.extract_strided_slice %27 {offsets = [0, 0, 24], sizes = [2, 16, 8], strides = [1, 1, 1]} : vector<2x16x32xbf16> to vector<2x16x8xbf16>
    %117 = vector.extract_strided_slice %34 {offsets = [0, 0, 24], sizes = [2, 16, 8], strides = [1, 1, 1]} : vector<2x16x32xbf16> to vector<2x16x8xbf16>
    %118 = vector.extract_strided_slice %41 {offsets = [0, 0, 24], sizes = [2, 16, 8], strides = [1, 1, 1]} : vector<2x16x32xbf16> to vector<2x16x8xbf16>
    "tpu.trace_start"() <{level = 10 : i32, message = "bqd,bkd->bqk"}> : () -> ()
    %cst_43 = arith.constant dense<0.000000e+00> : vector<2x16x16xf32>
    %119 = tpu.matmul %116, %117, %cst_43 {dimension_numbers = #tpu.dot_dimension_numbers<[2], [2], [1], [1], [0, 0, 0, 1, 1, 1], [0], [0]>} : vector<2x16x8xbf16>, vector<2x16x8xbf16>, vector<2x16x16xf32> -> vector<2x16x16xf32>
    "tpu.trace_stop"() : () -> ()
    %cst_44 = arith.constant 0.353553385 : f32
    %120 = vector.broadcast %cst_44 : f32 to vector<2x16x16xf32>
    %121 = arith.mulf %119, %120 : vector<2x16x16xf32>
    %cst_45 = arith.constant dense<0xFF800000> : vector<2x16xf32>
    %122 = vector.multi_reduction <maximumf>, %121, %cst_45 [2] : vector<2x16x16xf32> to vector<2x16xf32>
    %123 = vector.shape_cast %122 : vector<2x16xf32> to vector<2x16x1xf32>
    %124 = vector.broadcast %123 : vector<2x16x1xf32> to vector<2x16x16xf32>
    %125 = arith.subf %121, %124 : vector<2x16x16xf32>
    %126 = math.exp %125 : vector<2x16x16xf32>
    %cst_46 = arith.constant dense<0.000000e+00> : vector<2x16xf32>
    %127 = vector.multi_reduction <add>, %126, %cst_46 [2] : vector<2x16x16xf32> to vector<2x16xf32>
    %128 = vector.shape_cast %127 : vector<2x16xf32> to vector<2x16x1xf32>
    %129 = tpu.reciprocal %128 {approx = true} : vector<2x16x1xf32> -> vector<2x16x1xf32>
    %130 = vector.broadcast %129 : vector<2x16x1xf32> to vector<2x16x16xf32>
    %131 = arith.mulf %126, %130 : vector<2x16x16xf32>
    %132 = arith.truncf %131 : vector<2x16x16xf32> to vector<2x16x16xbf16>
    "tpu.trace_start"() <{level = 10 : i32, message = "bqk,bkd->bqd"}> : () -> ()
    %cst_47 = arith.constant dense<0.000000e+00> : vector<2x16x8xf32>
    %133 = tpu.matmul %132, %118, %cst_47 {dimension_numbers = #tpu.dot_dimension_numbers<[2], [1], [1], [2], [0, 0, 0, 1, 1, 2], [0], [0]>} : vector<2x16x16xbf16>, vector<2x16x8xbf16>, vector<2x16x8xf32> -> vector<2x16x8xf32>
    "tpu.trace_stop"() : () -> ()
    %134 = vector.shape_cast %133 : vector<2x16x8xf32> to vector<32x8xf32>
    %135 = arith.truncf %134 : vector<32x8xf32> to vector<32x8xbf16>
    %136 = vector.extract_strided_slice %42 {offsets = [3, 0, 0], sizes = [1, 8, 32], strides = [1, 1, 1]} : vector<4x8x32xbf16> to vector<1x8x32xbf16>
    %137 = vector.shape_cast %136 : vector<1x8x32xbf16> to vector<8x32xbf16>
    %cst_48 = arith.constant dense<0.000000e+00> : vector<32x32xf32>
    %138 = tpu.matmul %135, %137, %cst_48 {dimension_numbers = #tpu.dot_dimension_numbers<[1], [0], [0], [1], [0, 0, 1, 1], [], []>} : vector<32x8xbf16>, vector<8x32xbf16>, vector<32x32xf32> -> vector<32x32xf32>
    %139 = arith.addf %115, %138 : vector<32x32xf32>
    %140 = arith.addf %1, %139 : vector<32x32xf32>
    %c0_49 = arith.constant 0 : index
    %c0_50 = arith.constant 0 : index
    %141 = vector.load %arg9[%c0_49, %c0_50] : memref<1x32xf32, #tpu.memory_space<vmem>>, vector<1x32xf32>
    %142 = vector.broadcast %141 : vector<1x32xf32> to vector<32x32xf32>
    %143 = arith.addf %140, %142 : vector<32x32xf32>
    %cst_51 = arith.constant dense<0.000000e+00> : vector<32xf32>
    %144 = vector.multi_reduction <add>, %143, %cst_51 [1] : vector<32x32xf32> to vector<32xf32>
    %145 = vector.shape_cast %144 : vector<32xf32> to vector<32x1xf32>
    %cst_52 = arith.constant 3.200000e+01 : f32
    %146 = vector.broadcast %cst_52 : f32 to vector<32x1xf32>
    %147 = arith.divf %145, %146 : vector<32x1xf32>
    %148 = vector.broadcast %147 : vector<32x1xf32> to vector<32x32xf32>
    %149 = arith.subf %143, %148 : vector<32x32xf32>
    %150 = arith.mulf %149, %149 : vector<32x32xf32>
    %cst_53 = arith.constant dense<0.000000e+00> : vector<32xf32>
    %151 = vector.multi_reduction <add>, %150, %cst_53 [1] : vector<32x32xf32> to vector<32xf32>
    %152 = vector.shape_cast %151 : vector<32xf32> to vector<32x1xf32>
    %cst_54 = arith.constant 3.200000e+01 : f32
    %153 = vector.broadcast %cst_54 : f32 to vector<32x1xf32>
    %154 = arith.divf %152, %153 : vector<32x1xf32>
    %155 = vector.broadcast %147 : vector<32x1xf32> to vector<32x32xf32>
    %156 = arith.subf %143, %155 : vector<32x32xf32>
    %cst_55 = arith.constant 9.99999974E-6 : f32
    %157 = vector.broadcast %cst_55 : f32 to vector<32x1xf32>
    %158 = arith.addf %154, %157 : vector<32x1xf32>
    %159 = math.rsqrt %158 : vector<32x1xf32>
    %160 = vector.broadcast %159 : vector<32x1xf32> to vector<32x32xf32>
    %161 = arith.mulf %156, %160 : vector<32x32xf32>
    %162 = arith.truncf %161 : vector<32x32xf32> to vector<32x32xbf16>
    %c0_56 = arith.constant 0 : index
    %c0_57 = arith.constant 0 : index
    %163 = vector.load %arg10[%c0_56, %c0_57] : memref<32x128xbf16, #tpu.memory_space<vmem>>, vector<32x128xbf16>
    %cst_58 = arith.constant dense<0.000000e+00> : vector<32x128xf32>
    %164 = tpu.matmul %162, %163, %cst_58 {dimension_numbers = #tpu.dot_dimension_numbers<[1], [0], [0], [1], [0, 0, 1, 1], [], []>} : vector<32x32xbf16>, vector<32x128xbf16>, vector<32x128xf32> -> vector<32x128xf32>
    %c0_59 = arith.constant 0 : index
    %c0_60 = arith.constant 0 : index
    %165 = vector.load %arg11[%c0_59, %c0_60] : memref<1x128xf32, #tpu.memory_space<vmem>>, vector<1x128xf32>
    %166 = vector.broadcast %165 : vector<1x128xf32> to vector<32x128xf32>
    %167 = arith.addf %164, %166 : vector<32x128xf32>
    %cst_61 = arith.constant 0.000000e+00 : f32
    %168 = vector.broadcast %cst_61 : f32 to vector<32x128xf32>
    %169 = arith.maximumf %167, %168 : vector<32x128xf32>
    %170 = arith.truncf %169 : vector<32x128xf32> to vector<32x128xbf16>
    %c0_62 = arith.constant 0 : index
    %c0_63 = arith.constant 0 : index
    %171 = vector.load %arg12[%c0_62, %c0_63] : memref<128x32xbf16, #tpu.memory_space<vmem>>, vector<128x32xbf16>
    %cst_64 = arith.constant dense<0.000000e+00> : vector<32x32xf32>
    %172 = tpu.matmul %170, %171, %cst_64 {dimension_numbers = #tpu.dot_dimension_numbers<[1], [0], [0], [1], [0, 0, 1, 1], [], []>} : vector<32x128xbf16>, vector<128x32xbf16>, vector<32x32xf32> -> vector<32x32xf32>
    %c0_65 = arith.constant 0 : index
    %c0_66 = arith.constant 0 : index
    %173 = vector.load %arg13[%c0_65, %c0_66] : memref<1x32xf32, #tpu.memory_space<vmem>>, vector<1x32xf32>
    %174 = vector.broadcast %173 : vector<1x32xf32> to vector<32x32xf32>
    %175 = arith.addf %172, %174 : vector<32x32xf32>
    %176 = arith.addf %143, %175 : vector<32x32xf32>
    %177 = vector.shape_cast %176 : vector<32x32xf32> to vector<2x16x32xf32>
    %c0_67 = arith.constant 0 : index
    %c0_68 = arith.constant 0 : index
    %c0_69 = arith.constant 0 : index
    %178 = vector.load %arg14[%c0_67, %c0_68, %c0_69] : memref<2x16x32xf32, #tpu.memory_space<vmem>>, vector<2x16x32xf32>
    tpu.vector_store %arg14[%c0_67, %c0_68, %c0_69], %177 {strides = array<i32>} : memref<2x16x32xf32, #tpu.memory_space<vmem>>, vector<2x16x32xf32>,
    return
  }
  func.func @transform_0(%arg0: i32) -> (i32, i32, i32) {
    %c0_i32 = arith.constant 0 : i32
    %c0_i32_0 = arith.constant 0 : i32
    %c0_i32_1 = arith.constant 0 : i32
    return %arg0, %c0_i32, %c0_i32_0 : i32, i32, i32
  }
  func.func @transform_1(%arg0: i32) -> (i32, i32) {
    %c0_i32 = arith.constant 0 : i32
    %c0_i32_0 = arith.constant 0 : i32
    %c0_i32_1 = arith.constant 0 : i32
    return %c0_i32, %c0_i32_0 : i32, i32
  }
  func.func @transform_2(%arg0: i32) -> (i32, i32) {
    %c0_i32 = arith.constant 0 : i32
    %c0_i32_0 = arith.constant 0 : i32
    %c0_i32_1 = arith.constant 0 : i32
    return %c0_i32, %c0_i32_0 : i32, i32
  }
  func.func @transform_3(%arg0: i32) -> (i32, i32) {
    %c0_i32 = arith.constant 0 : i32
    %c0_i32_0 = arith.constant 0 : i32
    %c0_i32_1 = arith.constant 0 : i32
    return %c0_i32, %c0_i32_0 : i32, i32
  }
  func.func @transform_4(%arg0: i32) -> (i32, i32) {
    %c0_i32 = arith.constant 0 : i32
    %c0_i32_0 = arith.constant 0 : i32
    %c0_i32_1 = arith.constant 0 : i32
    return %c0_i32, %c0_i32_0 : i32, i32
  }
  func.func @transform_5(%arg0: i32) -> (i32, i32) {
    %c0_i32 = arith.constant 0 : i32
    %c0_i32_0 = arith.constant 0 : i32
    %c0_i32_1 = arith.constant 0 : i32
    return %c0_i32, %c0_i32_0 : i32, i32
  }
  func.func @transform_6(%arg0: i32) -> (i32, i32) {
    %c0_i32 = arith.constant 0 : i32
    %c0_i32_0 = arith.constant 0 : i32
    %c0_i32_1 = arith.constant 0 : i32
    return %c0_i32, %c0_i32_0 : i32, i32
  }
  func.func @transform_7(%arg0: i32) -> (i32, i32, i32) {
    %c0_i32 = arith.constant 0 : i32
    %c0_i32_0 = arith.constant 0 : i32
    %c0_i32_1 = arith.constant 0 : i32
    %c0_i32_2 = arith.constant 0 : i32
    return %c0_i32, %c0_i32_0, %c0_i32_1 : i32, i32, i32
  }
  func.func @transform_8(%arg0: i32) -> (i32, i32) {
    %c0_i32 = arith.constant 0 : i32
    %c0_i32_0 = arith.constant 0 : i32
    %c0_i32_1 = arith.constant 0 : i32
    return %c0_i32, %c0_i32_0 : i32, i32
  }
  func.func @transform_9(%arg0: i32) -> (i32, i32) {
    %c0_i32 = arith.constant 0 : i32
    %c0_i32_0 = arith.constant 0 : i32
    %c0_i32_1 = arith.constant 0 : i32
    return %c0_i32, %c0_i32_0 : i32, i32
  }
  func.func @transform_10(%arg0: i32) -> (i32, i32) {
    %c0_i32 = arith.constant 0 : i32
    %c0_i32_0 = arith.constant 0 : i32
    %c0_i32_1 = arith.constant 0 : i32
    return %c0_i32, %c0_i32_0 : i32, i32
  }
  func.func @transform_11(%arg0: i32) -> (i32, i32) {
    %c0_i32 = arith.constant 0 : i32
    %c0_i32_0 = arith.constant 0 : i32
    %c0_i32_1 = arith.constant 0 : i32
    return %c0_i32, %c0_i32_0 : i32, i32
  }
  func.func @transform_12(%arg0: i32) -> (i32, i32) {
    %c0_i32 = arith.constant 0 : i32
    %c0_i32_0 = arith.constant 0 : i32
    %c0_i32_1 = arith.constant 0 : i32
    return %c0_i32, %c0_i32_0 : i32, i32
  }
  func.func @transform_13(%arg0: i32) -> (i32, i32, i32) {
    %c0_i32 = arith.constant 0 : i32
    %c0_i32_0 = arith.constant 0 : i32
    %c0_i32_1 = arith.constant 0 : i32
    return %arg0, %c0_i32, %c0_i32_0 : i32, i32, i32
  }
}

</mosaic_0001>

<llo_original>
// kernel: tpu_custom_call.1
$region0: #{tpu_custom_call.1}
  #allocation0 [shape = 'u32[]', space=smem, size = 0x4, offset = 0x4, fixed_abs, tag = 'smem constant byte address 0x4 - core index']
  #allocation1 [shape = 'u32[144,128]{1,0:T(1,128)}', space=vmem, size = 0x12000, scoped, tag = 'internal scratch']
  %s0 = inlined_call_operand.vmem [shape: f32[4,16,32], index: 0, kind: input, shape index: {}]
  %s1 = inlined_call_operand.vmem [shape: bf16[32,32], index: 1, kind: input, shape index: {}]
  %s2 = inlined_call_operand.vmem [shape: f32[1,32], index: 2, kind: input, shape index: {}]
  %s3 = inlined_call_operand.hbm [shape: bf16[32,32], index: 3, kind: input, shape index: {}]
  %s4 = inlined_call_operand.vmem [shape: f32[1,32], index: 4, kind: input, shape index: {}]
  %s5 = inlined_call_operand.hbm [shape: bf16[32,32], index: 5, kind: input, shape index: {}]
  %s6 = inlined_call_operand.hbm [shape: f32[1,32], index: 6, kind: input, shape index: {}]
  %s7 = inlined_call_operand.hbm [shape: bf16[4,8,32], index: 7, kind: input, shape index: {}]
  %s8 = inlined_call_operand.hbm [shape: f32[1,32], index: 8, kind: input, shape index: {}]
  %s9 = inlined_call_operand.vmem [shape: bf16[32,128], index: 9, kind: input, shape index: {}]
  %s10 = inlined_call_operand.vmem [shape: f32[1,128], index: 10, kind: input, shape index: {}]
  %s11 = inlined_call_operand.vmem [shape: bf16[128,32], index: 11, kind: input, shape index: {}]
  %s12 = inlined_call_operand.vmem [shape: f32[1,32], index: 12, kind: input, shape index: {}]
  %s13 = inlined_call_operand.hbm [shape: f32[4,16,32], index: 13, kind: output, shape index: {}]
  %s14 = sld [smem:[#allocation0]]
  $region105: #{tpu_custom_call.1} parent=0
    _
  %s16 = ssub.s32 1, %s14
  %s17 = scalar_select 0, %s16, %s14
  $region1: #{tpu_custom_call.1} parent=0
    #allocation2 [shape = 'u8[8192]{0}', space=vmem, size = 0x2000, scoped, tag = 'input window, operand 3, single buffered']
    #allocation3 [shape = 's32[2]{0}', space=sflag, size = 0x8, scoped, tag = 'scoped memory for tpu_custom_call.1']
    #allocation4 [shape = 's32[2]{0}', space=sflag, size = 0x8, scoped, tag = 'scoped memory for tpu_custom_call.1']
    #allocation5 [shape = 'u8[8192]{0}', space=vmem, size = 0x2000, scoped, tag = 'input window, operand 5, single buffered']
    #allocation6 [shape = 's32[1]{0}', space=sflag, size = 0x4, scoped, tag = 'scoped memory for tpu_custom_call.1']
    #allocation7 [shape = 'u8[512]{0}', space=vmem, size = 0x400, scoped, tag = 'input window, operand 6, single buffered']
    #allocation8 [shape = 'u8[8192]{0}', space=vmem, size = 0x2000, scoped, tag = 'input window, operand 7, single buffered']
    #allocation9 [shape = 's32[1]{0}', space=sflag, size = 0x4, scoped, tag = 'scoped memory for tpu_custom_call.1']
    #allocation10 [shape = 'u8[512]{0}', space=vmem, size = 0x400, scoped, tag = 'input window, operand 8, single buffered']
    #allocation11 [shape = 'u8[32768]{0}', space=vmem, size = 0x8000, scoped, tag = 'output window, operand 0']
    %18 = vsyncpa [#allocation3], 0
    %19 = vsyncpa [#allocation6], 0
    %20 = vsyncpa [#allocation9], 0
    %21 = vsyncpa [#allocation4], 0
    %s22 = scalar_lea.sflag [#allocation4], 1
    %23 = vsyncpa %s22, 0
    loop: start=0, step=1, limit=4
    $region2: #{tpu_custom_call.1} parent=1 // loop_pre_header
      _
    $region3: #{tpu_custom_call.1} parent=1 // loop_header
      %s25 = sphi 0, %s29
      %p26 = scmp.ge.s32.totalorder %s25, 4
      %s35 = sphi 0, %s37
      %s38 = sphi 0, %s35
      %s39 = sphi 0, %s38
      %s55 = sphi 0, %s39
      %s59 = sphi 0, %s59
      %s61 = sphi 0, %s59
      %s62 = sphi 0, %s61
      %s76 = sphi 0, %s62
      %s80 = sphi 0, %s80
      %s82 = sphi 0, %s80
      %s83 = sphi 0, %s82
      %s97 = sphi 0, %s83
      %s101 = sphi 0, %s101
      %s103 = sphi 0, %s101
      %s104 = sphi 0, %s103
      %s118 = sphi 0, %s104
      %s122 = sphi 0, %s122
      %s124 = sphi 0, %s122
      %s125 = sphi 0, %s124
      %s139 = sphi 0, %s125
      %s143 = sphi 0, %s143
      %s145 = sphi 0, %s143
      %s146 = sphi 0, %s145
      %s160 = sphi 0, %s146
      %s164 = sphi 0, %s164
      %s166 = sphi 0, %s164
      %s167 = sphi 0, %s166
      %s181 = sphi 0, %s167
      %s185 = sphi 0, %s185
      %s187 = sphi 0, %s185
      %s188 = sphi 0, %s187
      %s202 = sphi 0, %s188
      %s206 = sphi 0, %s206
      %s208 = sphi 0, %s206
      %s209 = sphi 0, %s208
      %s223 = sphi 0, %s209
      %s227 = sphi 0, %s227
      %s229 = sphi 0, %s227
      %s230 = sphi 0, %s229
      %s244 = sphi 0, %s230
      %s248 = sphi 0, %s248
      %s250 = sphi 0, %s248
      %s251 = sphi 0, %s250
      %s265 = sphi 0, %s251
      %s269 = sphi 0, %s269
      %s271 = sphi 0, %s269
      %s272 = sphi 0, %s271
      %s286 = sphi 0, %s272
      %s290 = sphi 0, %s290
      %s292 = sphi 0, %s290
      %s293 = sphi 0, %s292
      %s307 = sphi 0, %s293
      %s313 = sphi 0, %s315
      %s316 = sphi 0, %s313
      %s317 = sphi 0, %s316
      %s333 = sphi 0, %s317
    $region4: #{tpu_custom_call.1} parent=1 // loop_header_branch
      %28 = sbr.rel (%p26) target = $region8
    $region5: #{tpu_custom_call.1} parent=1 // loop_body
      %s30 = ssub.s32 %s25, 1
      %s31 = ssub.s32 %s25, 2
      %s32 = sadd.s32 %s25, 1
      %s33 = ssub.s32 %s25, %s32
      %p34 = scmp.eq.s32.totalorder %s33, 0
      %s36 = sadd.s32 %s35, 1
      %s37 = scalar_select %p34, %s35, %s36
      %p40 = pneg %p34
      %p41 = scmp.eq.s32.totalorder %s25, 1
      %p42 = por %p40, %p41
      %p43 = scmp.ne.s32.totalorder %s35, %s38
      %p44 = scmp.eq.s32.totalorder %s25, 0
      %p45 = por %p43, %p44
      %p46 = scmp.ne.s32.totalorder %s35, %s38
      %p47 = scmp.eq.s32.totalorder %s30, 1
      %p48 = por %p46, %p47
      %p49 = scmp.ne.s32.totalorder %s38, %s39
      %p50 = scmp.eq.s32.totalorder %s30, 0
      %p51 = por %p49, %p50
      %p52 = scmp.ne.s32.totalorder %s38, %s39
      %p53 = scmp.eq.s32.totalorder %s31, 1
      %p54 = por %p52, %p53
      %p56 = scmp.ne.s32.totalorder %s39, %s55
      %p57 = scmp.eq.s32.totalorder %s31, 0
      %p58 = por %p56, %p57
      %s60 = sadd.s32 %s59, 1
      %p63 = scmp.eq.s32.totalorder %s25, 1
      %p64 = scmp.ne.s32.totalorder %s59, %s61
      %p65 = scmp.eq.s32.totalorder %s25, 0
      %p66 = por %p64, %p65
      %p67 = scmp.ne.s32.totalorder %s59, %s61
      %p68 = scmp.eq.s32.totalorder %s30, 1
      %p69 = por %p67, %p68
      %p70 = scmp.ne.s32.totalorder %s61, %s62
      %p71 = scmp.eq.s32.totalorder %s30, 0
      %p72 = por %p70, %p71
      %p73 = scmp.ne.s32.totalorder %s61, %s62
      %p74 = scmp.eq.s32.totalorder %s31, 1
      %p75 = por %p73, %p74
      %p77 = scmp.ne.s32.totalorder %s62, %s76
      %p78 = scmp.eq.s32.totalorder %s31, 0
      %p79 = por %p77, %p78
      %s81 = sadd.s32 %s80, 1
      %p84 = scmp.eq.s32.totalorder %s25, 1
      %p85 = scmp.ne.s32.totalorder %s80, %s82
      %p86 = scmp.eq.s32.totalorder %s25, 0
      %p87 = por %p85, %p86
      %p88 = scmp.ne.s32.totalorder %s80, %s82
      %p89 = scmp.eq.s32.totalorder %s30, 1
      %p90 = por %p88, %p89
      %p91 = scmp.ne.s32.totalorder %s82, %s83
      %p92 = scmp.eq.s32.totalorder %s30, 0
      %p93 = por %p91, %p92
      %p94 = scmp.ne.s32.totalorder %s82, %s83
      %p95 = scmp.eq.s32.totalorder %s31, 1
      %p96 = por %p94, %p95
      %p98 = scmp.ne.s32.totalorder %s83, %s97
      %p99 = scmp.eq.s32.totalorder %s31, 0
      %p100 = por %p98, %p99
      %s102 = sadd.s32 %s101, 1
      %p105 = scmp.eq.s32.totalorder %s25, 1
      %p106 = scmp.ne.s32.totalorder %s101, %s103
      %p107 = scmp.eq.s32.totalorder %s25, 0
      %p108 = por %p106, %p107
      %p109 = scmp.ne.s32.totalorder %s101, %s103
      %p110 = scmp.eq.s32.totalorder %s30, 1
      %p111 = por %p109, %p110
      %p112 = scmp.ne.s32.totalorder %s103, %s104
      %p113 = scmp.eq.s32.totalorder %s30, 0
      %p114 = por %p112, %p113
      %p115 = scmp.ne.s32.totalorder %s103, %s104
      %p116 = scmp.eq.s32.totalorder %s31, 1
      %p117 = por %p115, %p116
      %p119 = scmp.ne.s32.totalorder %s104, %s118
      %p120 = scmp.eq.s32.totalorder %s31, 0
      %p121 = por %p119, %p120
      %s123 = sadd.s32 %s122, 1
      %p126 = scmp.eq.s32.totalorder %s25, 1
      %p127 = scmp.ne.s32.totalorder %s122, %s124
      %p128 = scmp.eq.s32.totalorder %s25, 0
      %p129 = por %p127, %p128
      %p130 = scmp.ne.s32.totalorder %s122, %s124
      %p131 = scmp.eq.s32.totalorder %s30, 1
      %p132 = por %p130, %p131
      %p133 = scmp.ne.s32.totalorder %s124, %s125
      %p134 = scmp.eq.s32.totalorder %s30, 0
      %p135 = por %p133, %p134
      %p136 = scmp.ne.s32.totalorder %s124, %s125
      %p137 = scmp.eq.s32.totalorder %s31, 1
      %p138 = por %p136, %p137
      %p140 = scmp.ne.s32.totalorder %s125, %s139
      %p141 = scmp.eq.s32.totalorder %s31, 0
      %p142 = por %p140, %p141
      %s144 = sadd.s32 %s143, 1
      %p147 = scmp.eq.s32.totalorder %s25, 1
      %p148 = scmp.ne.s32.totalorder %s143, %s145
      %p149 = scmp.eq.s32.totalorder %s25, 0
      %p150 = por %p148, %p149
      %p151 = scmp.ne.s32.totalorder %s143, %s145
      %p152 = scmp.eq.s32.totalorder %s30, 1
      %p153 = por %p151, %p152
      %p154 = scmp.ne.s32.totalorder %s145, %s146
      %p155 = scmp.eq.s32.totalorder %s30, 0
      %p156 = por %p154, %p155
      %p157 = scmp.ne.s32.totalorder %s145, %s146
      %p158 = scmp.eq.s32.totalorder %s31, 1
      %p159 = por %p157, %p158
      %p161 = scmp.ne.s32.totalorder %s146, %s160
      %p162 = scmp.eq.s32.totalorder %s31, 0
      %p163 = por %p161, %p162
      %s165 = sadd.s32 %s164, 1
      %p168 = scmp.eq.s32.totalorder %s25, 1
      %p169 = scmp.ne.s32.totalorder %s164, %s166
      %p170 = scmp.eq.s32.totalorder %s25, 0
      %p171 = por %p169, %p170
      %p172 = scmp.ne.s32.totalorder %s164, %s166
      %p173 = scmp.eq.s32.totalorder %s30, 1
      %p174 = por %p172, %p173
      %p175 = scmp.ne.s32.totalorder %s166, %s167
      %p176 = scmp.eq.s32.totalorder %s30, 0
      %p177 = por %p175, %p176
      %p178 = scmp.ne.s32.totalorder %s166, %s167
      %p179 = scmp.eq.s32.totalorder %s31, 1
      %p180 = por %p178, %p179
      %p182 = scmp.ne.s32.totalorder %s167, %s181
      %p183 = scmp.eq.s32.totalorder %s31, 0
      %p184 = por %p182, %p183
      %s186 = sadd.s32 %s185, 1
      %p189 = scmp.eq.s32.totalorder %s25, 1
      %p190 = scmp.ne.s32.totalorder %s185, %s187
      %p191 = scmp.eq.s32.totalorder %s25, 0
      %p192 = por %p190, %p191
      %p193 = scmp.ne.s32.totalorder %s185, %s187
      %p194 = scmp.eq.s32.totalorder %s30, 1
      %p195 = por %p193, %p194
      %p196 = scmp.ne.s32.totalorder %s187, %s188
      %p197 = scmp.eq.s32.totalorder %s30, 0
      %p198 = por %p196, %p197
      %p199 = scmp.ne.s32.totalorder %s187, %s188
      %p200 = scmp.eq.s32.totalorder %s31, 1
      %p201 = por %p199, %p200
      %p203 = scmp.ne.s32.totalorder %s188, %s202
      %p204 = scmp.eq.s32.totalorder %s31, 0
      %p205 = por %p203, %p204
      %s207 = sadd.s32 %s206, 1
      %p210 = scmp.eq.s32.totalorder %s25, 1
      %p211 = scmp.ne.s32.totalorder %s206, %s208
      %p212 = scmp.eq.s32.totalorder %s25, 0
      %p213 = por %p211, %p212
      %p214 = scmp.ne.s32.totalorder %s206, %s208
      %p215 = scmp.eq.s32.totalorder %s30, 1
      %p216 = por %p214, %p215
      %p217 = scmp.ne.s32.totalorder %s208, %s209
      %p218 = scmp.eq.s32.totalorder %s30, 0
      %p219 = por %p217, %p218
      %p220 = scmp.ne.s32.totalorder %s208, %s209
      %p221 = scmp.eq.s32.totalorder %s31, 1
      %p222 = por %p220, %p221
      %p224 = scmp.ne.s32.totalorder %s209, %s223
      %p225 = scmp.eq.s32.totalorder %s31, 0
      %p226 = por %p224, %p225
      %s228 = sadd.s32 %s227, 1
      %p231 = scmp.eq.s32.totalorder %s25, 1
      %p232 = scmp.ne.s32.totalorder %s227, %s229
      %p233 = scmp.eq.s32.totalorder %s25, 0
      %p234 = por %p232, %p233
      %p235 = scmp.ne.s32.totalorder %s227, %s229
      %p236 = scmp.eq.s32.totalorder %s30, 1
      %p237 = por %p235, %p236
      %p238 = scmp.ne.s32.totalorder %s229, %s230
      %p239 = scmp.eq.s32.totalorder %s30, 0
      %p240 = por %p238, %p239
      %p241 = scmp.ne.s32.totalorder %s229, %s230
      %p242 = scmp.eq.s32.totalorder %s31, 1
      %p243 = por %p241, %p242
      %p245 = scmp.ne.s32.totalorder %s230, %s244
      %p246 = scmp.eq.s32.totalorder %s31, 0
      %p247 = por %p245, %p246
      %s249 = sadd.s32 %s248, 1
      %p252 = scmp.eq.s32.totalorder %s25, 1
      %p253 = scmp.ne.s32.totalorder %s248, %s250
      %p254 = scmp.eq.s32.totalorder %s25, 0
      %p255 = por %p253, %p254
      %p256 = scmp.ne.s32.totalorder %s248, %s250
      %p257 = scmp.eq.s32.totalorder %s30, 1
      %p258 = por %p256, %p257
      %p259 = scmp.ne.s32.totalorder %s250, %s251
      %p260 = scmp.eq.s32.totalorder %s30, 0
      %p261 = por %p259, %p260
      %p262 = scmp.ne.s32.totalorder %s250, %s251
      %p263 = scmp.eq.s32.totalorder %s31, 1
      %p264 = por %p262, %p263
      %p266 = scmp.ne.s32.totalorder %s251, %s265
      %p267 = scmp.eq.s32.totalorder %s31, 0
      %p268 = por %p266, %p267
      %s270 = sadd.s32 %s269, 1
      %p273 = scmp.eq.s32.totalorder %s25, 1
      %p274 = scmp.ne.s32.totalorder %s269, %s271
      %p275 = scmp.eq.s32.totalorder %s25, 0
      %p276 = por %p274, %p275
      %p277 = scmp.ne.s32.totalorder %s269, %s271
      %p278 = scmp.eq.s32.totalorder %s30, 1
      %p279 = por %p277, %p278
      %p280 = scmp.ne.s32.totalorder %s271, %s272
      %p281 = scmp.eq.s32.totalorder %s30, 0
      %p282 = por %p280, %p281
      %p283 = scmp.ne.s32.totalorder %s271, %s272
      %p284 = scmp.eq.s32.totalorder %s31, 1
      %p285 = por %p283, %p284
      %p287 = scmp.ne.s32.totalorder %s272, %s286
      %p288 = scmp.eq.s32.totalorder %s31, 0
      %p289 = por %p287, %p288
      %s291 = sadd.s32 %s290, 1
      %p294 = scmp.eq.s32.totalorder %s25, 1
      %p295 = scmp.ne.s32.totalorder %s290, %s292
      %p296 = scmp.eq.s32.totalorder %s25, 0
      %p297 = por %p295, %p296
      %p298 = scmp.ne.s32.totalorder %s290, %s292
      %p299 = scmp.eq.s32.totalorder %s30, 1
      %p300 = por %p298, %p299
      %p301 = scmp.ne.s32.totalorder %s292, %s293
      %p302 = scmp.eq.s32.totalorder %s30, 0
      %p303 = por %p301, %p302
      %p304 = scmp.ne.s32.totalorder %s292, %s293
      %p305 = scmp.eq.s32.totalorder %s31, 1
      %p306 = por %p304, %p305
      %p308 = scmp.ne.s32.totalorder %s293, %s307
      %p309 = scmp.eq.s32.totalorder %s31, 0
      %p310 = por %p308, %p309
      %s311 = ssub.s32 %s25, %s32
      %p312 = scmp.eq.s32.totalorder %s311, 0
      %s314 = sadd.s32 %s313, 1
      %s315 = scalar_select %p312, %s313, %s314
      %p318 = pneg %p312
      %p319 = scmp.eq.s32.totalorder %s25, 1
      %p320 = por %p318, %p319
      %p321 = scmp.ne.s32.totalorder %s313, %s316
      %p322 = scmp.eq.s32.totalorder %s25, 0
      %p323 = por %p321, %p322
      %p324 = scmp.ne.s32.totalorder %s313, %s316
      %p325 = scmp.eq.s32.totalorder %s30, 1
      %p326 = por %p324, %p325
      %p327 = scmp.ne.s32.totalorder %s316, %s317
      %p328 = scmp.eq.s32.totalorder %s30, 0
      %p329 = por %p327, %p328
      %p330 = scmp.ne.s32.totalorder %s316, %s317
      %p331 = scmp.eq.s32.totalorder %s31, 1
      %p332 = por %p330, %p331
      %p334 = scmp.ne.s32.totalorder %s317, %s333
      %p335 = scmp.eq.s32.totalorder %s31, 0
      %p336 = por %p334, %p335
      %p337 = scmp.le.s32.totalorder 1, %s25
      %p338 = scmp.lt.s32.totalorder %s25, 3
      %p339 = pnand %p337, %p338
      %p340 = pneg %p339
      // Predicated region
      $region9: #{tpu_custom_call.1} parent=5 // pred_check
        _
      $region10: #{tpu_custom_call.1} parent=5 // pred_check_branch
        %342 = sbr.rel (%p339) target = $region12
      $region11: #{tpu_custom_call.1} parent=5 // pred_region
        %s343 = ssub.s32 %s25, 1
        // Predicated region
        $region13: #{tpu_custom_call.1} parent=11 // pred_check
          %p344 = pneg %p72
        $region14: #{tpu_custom_call.1} parent=11 // pred_check_branch
          %346 = sbr.rel (%p344) target = $region16
        $region15: #{tpu_custom_call.1} parent=11 // pred_region
          _
        $region16: #{tpu_custom_call.1} parent=11 // pred_fallthru
          _
        // Predicated region
        $region17: #{tpu_custom_call.1} parent=11 // pred_check
          %p347 = pneg %p93
        $region18: #{tpu_custom_call.1} parent=11 // pred_check_branch
          %349 = sbr.rel (%p347) target = $region20
        $region19: #{tpu_custom_call.1} parent=11 // pred_region
          _
        $region20: #{tpu_custom_call.1} parent=11 // pred_fallthru
          _
        // Predicated region
        $region21: #{tpu_custom_call.1} parent=11 // pred_check
          %p350 = pneg %p114
        $region22: #{tpu_custom_call.1} parent=11 // pred_check_branch
          %352 = sbr.rel (%p350) target = $region24
        $region23: #{tpu_custom_call.1} parent=11 // pred_region
          %s354 = ssub.s32 256, 256
          %355 = vsyncadd [#allocation3], %s354
          %s356 = sshll.u32 [#allocation2], 4
          %s357 = int_to_ptr.vmem [resolvable:$true] %s356
          %362 = dma.hbm_to_vmem [thread:$0]  %s3, 256, %s357, [#allocation3], 64, 64, 4
        $region24: #{tpu_custom_call.1} parent=11 // pred_fallthru
          _
        // Predicated region
        $region25: #{tpu_custom_call.1} parent=11 // pred_check
          %p363 = pneg %p135
        $region26: #{tpu_custom_call.1} parent=11 // pred_check_branch
          %365 = sbr.rel (%p363) target = $region28
        $region27: #{tpu_custom_call.1} parent=11 // pred_region
          _
        $region28: #{tpu_custom_call.1} parent=11 // pred_fallthru
          _
        // Predicated region
        $region29: #{tpu_custom_call.1} parent=11 // pred_check
          %p366 = pneg %p156
        $region30: #{tpu_custom_call.1} parent=11 // pred_check_branch
          %368 = sbr.rel (%p366) target = $region32
        $region31: #{tpu_custom_call.1} parent=11 // pred_region
          %s370 = ssub.s32 256, 256
          %371 = vsyncadd [#allocation6], %s370
          %s372 = sshll.u32 [#allocation5], 4
          %s373 = int_to_ptr.vmem [resolvable:$true] %s372
          %378 = dma.hbm_to_vmem [thread:$0]  %s5, 256, %s373, [#allocation6], 64, 64, 4
        $region32: #{tpu_custom_call.1} parent=11 // pred_fallthru
          _
        // Predicated region
        $region33: #{tpu_custom_call.1} parent=11 // pred_check
          %p379 = pneg %p177
        $region34: #{tpu_custom_call.1} parent=11 // pred_check_branch
          %381 = sbr.rel (%p379) target = $region36
        $region35: #{tpu_custom_call.1} parent=11 // pred_region
          %s383 = ssub.s32 16, 16
          %384 = vsyncadd [#allocation6], %s383
          %s386 = sshll.u32 [#allocation7], 4
          %s387 = int_to_ptr.vmem [resolvable:$true] %s386
          %389 = dma.hbm_to_vmem [thread:$0]  %s6, 16, %s387, [#allocation6]
        $region36: #{tpu_custom_call.1} parent=11 // pred_fallthru
          _
        // Predicated region
        $region37: #{tpu_custom_call.1} parent=11 // pred_check
          %p390 = pneg %p198
        $region38: #{tpu_custom_call.1} parent=11 // pred_check_branch
          %392 = sbr.rel (%p390) target = $region40
        $region39: #{tpu_custom_call.1} parent=11 // pred_region
          %s394 = ssub.s32 256, 256
          %395 = vsyncadd [#allocation9], %s394
          %s396 = sshll.u32 [#allocation8], 4
          %s397 = int_to_ptr.vmem [resolvable:$true] %s396
          %402 = dma.hbm_to_vmem [thread:$0]  %s7, 256, %s397, [#allocation9], 64, 64, 4
        $region40: #{tpu_custom_call.1} parent=11 // pred_fallthru
          _
        // Predicated region
        $region41: #{tpu_custom_call.1} parent=11 // pred_check
          %p403 = pneg %p219
        $region42: #{tpu_custom_call.1} parent=11 // pred_check_branch
          %405 = sbr.rel (%p403) target = $region44
        $region43: #{tpu_custom_call.1} parent=11 // pred_region
          %s407 = ssub.s32 16, 16
          %408 = vsyncadd [#allocation9], %s407
          %s410 = sshll.u32 [#allocation10], 4
          %s411 = int_to_ptr.vmem [resolvable:$true] %s410
          %413 = dma.hbm_to_vmem [thread:$0]  %s8, 16, %s411, [#allocation9]
        $region44: #{tpu_custom_call.1} parent=11 // pred_fallthru
          _
        // Predicated region
        $region45: #{tpu_custom_call.1} parent=11 // pred_check
          %p414 = pneg %p240
        $region46: #{tpu_custom_call.1} parent=11 // pred_check_branch
          %416 = sbr.rel (%p414) target = $region48
        $region47: #{tpu_custom_call.1} parent=11 // pred_region
          _
        $region48: #{tpu_custom_call.1} parent=11 // pred_fallthru
          _
        // Predicated region
        $region49: #{tpu_custom_call.1} parent=11 // pred_check
          %p417 = pneg %p261
        $region50: #{tpu_custom_call.1} parent=11 // pred_check_branch
          %419 = sbr.rel (%p417) target = $region52
        $region51: #{tpu_custom_call.1} parent=11 // pred_region
          _
        $region52: #{tpu_custom_call.1} parent=11 // pred_fallthru
          _
        // Predicated region
        $region53: #{tpu_custom_call.1} parent=11 // pred_check
          %p420 = pneg %p282
        $region54: #{tpu_custom_call.1} parent=11 // pred_check_branch
          %422 = sbr.rel (%p420) target = $region56
        $region55: #{tpu_custom_call.1} parent=11 // pred_region
          _
        $region56: #{tpu_custom_call.1} parent=11 // pred_fallthru
          _
        // Predicated region
        $region57: #{tpu_custom_call.1} parent=11 // pred_check
          %p423 = pneg %p303
        $region58: #{tpu_custom_call.1} parent=11 // pred_check_branch
          %425 = sbr.rel (%p423) target = $region60
        $region59: #{tpu_custom_call.1} parent=11 // pred_region
          _
        $region60: #{tpu_custom_call.1} parent=11 // pred_fallthru
          _
      $region12: #{tpu_custom_call.1} parent=5 // pred_fallthru
        _
      %p426 = scmp.lt.s32.totalorder %s25, 2
      // Predicated region
      $region61: #{tpu_custom_call.1} parent=5 // pred_check
        %p427 = pneg %p426
      $region62: #{tpu_custom_call.1} parent=5 // pred_check_branch
        %429 = sbr.rel (%p427) target = $region64
      $region63: #{tpu_custom_call.1} parent=5 // pred_region
        // Predicated region
        $region65: #{tpu_custom_call.1} parent=63 // pred_check
          %p430 = pneg %p45
        $region66: #{tpu_custom_call.1} parent=63 // pred_check_branch
          %432 = sbr.rel (%p430) target = $region68
        $region67: #{tpu_custom_call.1} parent=63 // pred_region
          %s433 = smul.u32 2, %s25
          %p434 = scmp.lt.s32.totalorder %s433, 3
          %s435 = scalar_select %p434, %s433, 3
          %s436 = smul.addr %s435, 2
          %s437 = smul.addr %s436, 8
          %s438 = scalar_lea.vmem %s0, %s437
          %s439 = smul.u32 2, %s25
        $region68: #{tpu_custom_call.1} parent=63 // pred_fallthru
          _
      $region64: #{tpu_custom_call.1} parent=5 // pred_fallthru
        _
      %p440 = scmp.le.s32.totalorder 1, %s25
      %p441 = scmp.lt.s32.totalorder %s25, 3
      %p442 = pnand %p440, %p441
      %p443 = pneg %p442
      // Predicated region
      $region69: #{tpu_custom_call.1} parent=5 // pred_check
        _
      $region70: #{tpu_custom_call.1} parent=5 // pred_check_branch
        %445 = sbr.rel (%p442) target = $region72
      $region71: #{tpu_custom_call.1} parent=5 // pred_region
        %s446 = ssub.s32 %s25, 1
        // Predicated region
        $region73: #{tpu_custom_call.1} parent=71 // pred_check
          %p447 = pneg %p114
        $region74: #{tpu_custom_call.1} parent=71 // pred_check_branch
          %449 = sbr.rel (%p447) target = $region76
        $region75: #{tpu_custom_call.1} parent=71 // pred_region
          %450 = dma.done [#allocation3], 256
        $region76: #{tpu_custom_call.1} parent=71 // pred_fallthru
          _
        // Predicated region
        $region77: #{tpu_custom_call.1} parent=71 // pred_check
          %p451 = pneg %p156
        $region78: #{tpu_custom_call.1} parent=71 // pred_check_branch
          %453 = sbr.rel (%p451) target = $region80
        $region79: #{tpu_custom_call.1} parent=71 // pred_region
          %454 = dma.done [#allocation6], 256
        $region80: #{tpu_custom_call.1} parent=71 // pred_fallthru
          _
        // Predicated region
        $region81: #{tpu_custom_call.1} parent=71 // pred_check
          %p455 = pneg %p177
        $region82: #{tpu_custom_call.1} parent=71 // pred_check_branch
          %457 = sbr.rel (%p455) target = $region84
        $region83: #{tpu_custom_call.1} parent=71 // pred_region
          %458 = dma.done [#allocation6], 16
        $region84: #{tpu_custom_call.1} parent=71 // pred_fallthru
          _
        // Predicated region
        $region85: #{tpu_custom_call.1} parent=71 // pred_check
          %p459 = pneg %p198
        $region86: #{tpu_custom_call.1} parent=71 // pred_check_branch
          %461 = sbr.rel (%p459) target = $region88
        $region87: #{tpu_custom_call.1} parent=71 // pred_region
          %462 = dma.done [#allocation9], 256
        $region88: #{tpu_custom_call.1} parent=71 // pred_fallthru
          _
        // Predicated region
        $region89: #{tpu_custom_call.1} parent=71 // pred_check
          %p463 = pneg %p219
        $region90: #{tpu_custom_call.1} parent=71 // pred_check_branch
          %465 = sbr.rel (%p463) target = $region92
        $region91: #{tpu_custom_call.1} parent=71 // pred_region
          %466 = dma.done [#allocation9], 16
        $region92: #{tpu_custom_call.1} parent=71 // pred_fallthru
          _
        %s467 = smul.u32 2, %s30
        %p468 = scmp.lt.s32.totalorder %s467, 3
        %s469 = scalar_select %p468, %s467, 3
        %s470 = smul.addr %s469, 2
        %s471 = smul.addr %s470, 8
        %s472 = scalar_lea.vmem %s0, %s471
        %p473 = pneg %p51
        %p474 = pneg %p48
        %p475 = pneg %p72
        %p476 = pneg %p69
        %p477 = pneg %p93
        %p478 = pneg %p90
        %p479 = pneg %p114
        %p480 = pneg %p111
        %p481 = pneg %p135
        %p482 = pneg %p132
        %p483 = pneg %p156
        %p484 = pneg %p153
        %p485 = pneg %p177
        %p486 = pneg %p174
        %p487 = pneg %p198
        %p488 = pneg %p195
        %p489 = pneg %p219
        %p490 = pneg %p216
        %p491 = pneg %p240
        %p492 = pneg %p237
        %p493 = pneg %p261
        %p494 = pneg %p258
        %p495 = pneg %p282
        %p496 = pneg %p279
        %p497 = pneg %p303
        %p498 = pneg %p300
        %p499 = pneg %p329
        %p500 = pneg %p326
        %s501 = sand.u32 %s316, 1
        %s502 = scalar_lea.sflag [#allocation4], %s501
        %s503 = sand.u32 %s316, 1
        %s504 = smul.addr %s503, 32
        %s505 = scalar_lea.vmem [#allocation11], %s504
        %s506 = smul.u32 2, %s30
        %p507 = scmp.lt.s32.totalorder %s506, 3
        %s508 = scalar_select %p507, %s506, 3
        %s509 = smul.addr %s508, 2
        %s510 = smul.addr %s509, 8
        %s511 = scalar_lea.vmem %s0, %s510
        %s512 = smul.u32 2, %s30
        %s513 = smul.u32 2, %s30
        %v515 = vld [vmem:[%s511] sm:$0xff]
        %v516 = vld [vmem:[%s511 + $0x8] sm:$0xff]
        %v517 = vld [vmem:[%s511 + $0x10] sm:$0xff]
        %v518 = vld [vmem:[%s511 + $0x18] sm:$0xff]
        %vm519 = vcmask 261120
        %v520 = vsel %vm519, %v515, 0.0
        %521 = vadd.xlane.f32.xlu0 %v520
        %v522 = vpop.xlane.xlu0 %521
        %v523 = vsel %vm519, %v516, 0.0
        %524 = vadd.xlane.f32.xlu0 %v523
        %v525 = vpop.xlane.xlu0 %524
        %v526 = vsel %vm519, %v517, 0.0
        %527 = vadd.xlane.f32.xlu0 %v526
        %v528 = vpop.xlane.xlu0 %527
        %v529 = vsel %vm519, %v518, 0.0
        %530 = vadd.xlane.f32.xlu0 %v529
        %v531 = vpop.xlane.xlu0 %530
        %v532 = vrcp.pop 32.0
        %v533 = vmul.f32 %v522, %v532
        %v534 = vmul.f32 %v525, %v532
        %v535 = vmul.f32 %v528, %v532
        %v536 = vmul.f32 %v531, %v532
        %v537 = vsub.f32 %v515, %v533
        %v538 = vsub.f32 %v516, %v534
        %v539 = vsub.f32 %v517, %v535
        %v540 = vsub.f32 %v518, %v536
        %v541 = vmul.f32 %v537, %v537
        %v542 = vmul.f32 %v538, %v538
        %v543 = vmul.f32 %v539, %v539
        %v544 = vmul.f32 %v540, %v540
        %v545 = vsel %vm519, %v541, 0.0
        %546 = vadd.xlane.f32.xlu0 %v545
        %v547 = vpop.xlane.xlu0 %546
        %v548 = vsel %vm519, %v542, 0.0
        %549 = vadd.xlane.f32.xlu0 %v548
        %v550 = vpop.xlane.xlu0 %549
        %v551 = vsel %vm519, %v543, 0.0
        %552 = vadd.xlane.f32.xlu0 %v551
        %v553 = vpop.xlane.xlu0 %552
        %v554 = vsel %vm519, %v544, 0.0
        %555 = vadd.xlane.f32.xlu0 %v554
        %v556 = vpop.xlane.xlu0 %555
        %v557 = vmul.f32 %v547, %v532
        %v558 = vmul.f32 %v550, %v532
        %v559 = vmul.f32 %v553, %v532
        %v560 = vmul.f32 %v556, %v532
        %v561 = vadd.f32 %v557, 1e-05
        %v562 = vadd.f32 %v558, 1e-05
        %v563 = vadd.f32 %v559, 1e-05
        %v564 = vadd.f32 %v560, 1e-05
        %v565 = vrsqrt.pop %v561
        %v566 = vrsqrt.pop %v562
        %v567 = vrsqrt.pop %v563
        %v568 = vrsqrt.pop %v564
        %v569 = vmul.f32 %v537, %v565
        %v570 = vmul.f32 %v538, %v566
        %v571 = vmul.f32 %v539, %v567
        %v572 = vmul.f32 %v540, %v568
        %v573 = vpack.c.bf16 %v570, %v569
        %v574 = vpack.c.bf16 %v572, %v571
        %v575 = vld [vmem:[%s1] sm:$0xf]
        %v576 = vld [vmem:[%s1 + $0x4] sm:$0xf]
        %v577 = vld [vmem:[%s1 + $0x8] sm:$0xf]
        %v578 = vld [vmem:[%s1 + $0xc] sm:$0xf]
        %v579 = vld [vmem:[%s2] sm:$0x1]
        %v581 = vlaneseq
        %v582 = vshrl.u32 %v581, 7
        %v583 = vsub.s32 0, %v582
        %v584 = vrot.slane %v579, %v583
        %v590 = vunpack.c.l.b16 %v575
        %v591 = vunpack.c.l.b16 %v576
        %v592 = vunpack.c.l.b16 %v577
        %v593 = vunpack.c.l.b16 %v578
        %v594 = vpack.c.b16 %v591, %v590
        %v595 = vpack.c.b16 %v593, %v592
        %v599 = vsel %vm519, %v573, 0
        %v602 = vsel %vm519, %v574, 0
        %604 = vmatprep.subr.bf16.mxu0 0
        %605 = vmatpush1.bf16.msra.mxu0 %v594
        %606 = vmatprep.subr.bf16.mxu0 0
        %607 = vmatpush1.bf16.msra.mxu0 %v595
        %608 = vmatprep.subr.bf16.mxu0 0
        %609 = vmatpush1.bf16.msra.mxu0 0
        %610 = vmatprep.subr.bf16.mxu0 0
        %611 = vmatpush1.bf16.msra.mxu0 0
        %612 = vmatprep.subr.bf16.mxu0 0
        %613 = vmatpush1.bf16.msra.mxu0 0
        %614 = vmatprep.subr.bf16.mxu0 0
        %615 = vmatpush1.bf16.msra.mxu0 0
        %616 = vmatprep.subr.bf16.mxu0 0
        %617 = vmatpush1.bf16.msra.mxu0 0
        %618 = vmatprep.subr.bf16.mxu0 0
        %619 = vmatpush1.bf16.msra.mxu0 0
        %620 = vmatprep.subr.bf16.mxu0 0
        %621 = vmatpush1.bf16.msra.mxu0 0
        %622 = vmatprep.subr.bf16.mxu0 0
        %623 = vmatpush1.bf16.msra.mxu0 0
        %624 = vmatprep.subr.bf16.mxu0 0
        %625 = vmatpush1.bf16.msra.mxu0 0
        %626 = vmatprep.subr.bf16.mxu0 0
        %627 = vmatpush1.bf16.msra.mxu0 0
        %628 = vmatprep.subr.bf16.mxu0 0
        %629 = vmatpush1.bf16.msra.mxu0 0
        %630 = vmatprep.subr.bf16.mxu0 0
        %631 = vmatpush1.bf16.msra.mxu0 0
        %632 = vmatprep.subr.bf16.mxu0 0
        %633 = vmatpush1.bf16.msra.mxu0 0
        %634 = vmatprep.subr.bf16.mxu0 0
        %635 = vmatpush1.bf16.msra.mxu0 0
        %636 = vmatprep.mubr.bf16.mxu0 0
        %637 = vmatmul.mubr.bf16.gmra.mrb[0].mxu0 %v599
        %v638 = vpop.f32.mrb[0].mxu0
        %v639 = vadd.f32 %v584, %v638
        %v640 = vpop.f32.mrb[0].mxu0
        %v641 = vpop.f32.mrb[0].mxu0
        %v642 = vadd.f32 %v584, %v641
        %v643 = vpop.f32.mrb[0].mxu0
        %644 = vmatprep.mubr.bf16.mxu0 0
        %645 = vmatmul.mubr.bf16.gmra.mrb[0].mxu0 %v602
        %v646 = vpop.f32.mrb[0].mxu0
        %v647 = vadd.f32 %v584, %v646
        %v648 = vpop.f32.mrb[0].mxu0
        %v649 = vpop.f32.mrb[0].mxu0
        %v650 = vadd.f32 %v584, %v649
        %v651 = vpop.f32.mrb[0].mxu0
        %652 = vdwg.mxu0
        %v653 = vpack.c.bf16 %v642, %v639
        %v654 = vpack.c.bf16 %v650, %v647
        %v655 = vld [vmem:[#allocation2] sm:$0xf]
        %v656 = vld [vmem:[#allocation2 + $0x4] sm:$0xf]
        %v657 = vld [vmem:[#allocation2 + $0x8] sm:$0xf]
        %v658 = vld [vmem:[#allocation2 + $0xc] sm:$0xf]
        %v659 = vld [vmem:[%s4] sm:$0x1]
        %v661 = vlaneseq
        %v662 = vshrl.u32 %v661, 7
        %v663 = vsub.s32 0, %v662
        %v664 = vrot.slane %v659, %v663
        %v670 = vunpack.c.l.b16 %v655
        %v671 = vunpack.c.l.b16 %v656
        %v672 = vunpack.c.l.b16 %v657
        %v673 = vunpack.c.l.b16 %v658
        %v674 = vpack.c.b16 %v671, %v670
        %v675 = vpack.c.b16 %v673, %v672
        %678 = vmatprep.subr.bf16.mxu0 0
        %679 = vmatpush1.bf16.msra.mxu0 %v674
        %680 = vmatprep.subr.bf16.mxu0 0
        %681 = vmatpush1.bf16.msra.mxu0 %v675
        %682 = vmatprep.subr.bf16.mxu0 0
        %683 = vmatpush1.bf16.msra.mxu0 0
        %684 = vmatprep.subr.bf16.mxu0 0
        %685 = vmatpush1.bf16.msra.mxu0 0
        %686 = vmatprep.subr.bf16.mxu0 0
        %687 = vmatpush1.bf16.msra.mxu0 0
        %688 = vmatprep.subr.bf16.mxu0 0
        %689 = vmatpush1.bf16.msra.mxu0 0
        %690 = vmatprep.subr.bf16.mxu0 0
        %691 = vmatpush1.bf16.msra.mxu0 0
        %692 = vmatprep.subr.bf16.mxu0 0
        %693 = vmatpush1.bf16.msra.mxu0 0
        %694 = vmatprep.subr.bf16.mxu0 0
        %695 = vmatpush1.bf16.msra.mxu0 0
        %696 = vmatprep.subr.bf16.mxu0 0
        %697 = vmatpush1.bf16.msra.mxu0 0
        %698 = vmatprep.subr.bf16.mxu0 0
        %699 = vmatpush1.bf16.msra.mxu0 0
        %700 = vmatprep.subr.bf16.mxu0 0
        %701 = vmatpush1.bf16.msra.mxu0 0
        %702 = vmatprep.subr.bf16.mxu0 0
        %703 = vmatpush1.bf16.msra.mxu0 0
        %704 = vmatprep.subr.bf16.mxu0 0
        %705 = vmatpush1.bf16.msra.mxu0 0
        %706 = vmatprep.subr.bf16.mxu0 0
        %707 = vmatpush1.bf16.msra.mxu0 0
        %708 = vmatprep.subr.bf16.mxu0 0
        %709 = vmatpush1.bf16.msra.mxu0 0
        %710 = vmatprep.mubr.bf16.mxu0 0
        %711 = vmatmul.mubr.bf16.gmra.mrb[0].mxu0 %v599
        %v712 = vpop.f32.mrb[0].mxu0
        %v713 = vadd.f32 %v664, %v712
        %v714 = vpop.f32.mrb[0].mxu0
        %v715 = vpop.f32.mrb[0].mxu0
        %v716 = vadd.f32 %v664, %v715
        %v717 = vpop.f32.mrb[0].mxu0
        %718 = vmatprep.mubr.bf16.mxu0 0
        %719 = vmatmul.mubr.bf16.gmra.mrb[0].mxu0 %v602
        %v720 = vpop.f32.mrb[0].mxu0
        %v721 = vadd.f32 %v664, %v720
        %v722 = vpop.f32.mrb[0].mxu0
        %v723 = vpop.f32.mrb[0].mxu0
        %v724 = vadd.f32 %v664, %v723
        %v725 = vpop.f32.mrb[0].mxu0
        %726 = vdwg.mxu0
        %v727 = vpack.c.bf16 %v716, %v713
        %v728 = vpack.c.bf16 %v724, %v721
        %v729 = vld [vmem:[#allocation5] sm:$0xf]
        %v730 = vld [vmem:[#allocation5 + $0x4] sm:$0xf]
        %v731 = vld [vmem:[#allocation5 + $0x8] sm:$0xf]
        %v732 = vld [vmem:[#allocation5 + $0xc] sm:$0xf]
        %v733 = vld [vmem:[#allocation7] sm:$0x1]
        %v735 = vlaneseq
        %v736 = vshrl.u32 %v735, 7
        %v737 = vsub.s32 0, %v736
        %v738 = vrot.slane %v733, %v737
        %v744 = vunpack.c.l.b16 %v729
        %v745 = vunpack.c.l.b16 %v730
        %v746 = vunpack.c.l.b16 %v731
        %v747 = vunpack.c.l.b16 %v732
        %v748 = vpack.c.b16 %v745, %v744
        %v749 = vpack.c.b16 %v747, %v746
        %752 = vmatprep.subr.bf16.mxu0 0
        %753 = vmatpush1.bf16.msra.mxu0 %v748
        %754 = vmatprep.subr.bf16.mxu0 0
        %755 = vmatpush1.bf16.msra.mxu0 %v749
        %756 = vmatprep.subr.bf16.mxu0 0
        %757 = vmatpush1.bf16.msra.mxu0 0
        %758 = vmatprep.subr.bf16.mxu0 0
        %759 = vmatpush1.bf16.msra.mxu0 0
        %760 = vmatprep.subr.bf16.mxu0 0
        %761 = vmatpush1.bf16.msra.mxu0 0
        %762 = vmatprep.subr.bf16.mxu0 0
        %763 = vmatpush1.bf16.msra.mxu0 0
        %764 = vmatprep.subr.bf16.mxu0 0
        %765 = vmatpush1.bf16.msra.mxu0 0
        %766 = vmatprep.subr.bf16.mxu0 0
        %767 = vmatpush1.bf16.msra.mxu0 0
        %768 = vmatprep.subr.bf16.mxu0 0
        %769 = vmatpush1.bf16.msra.mxu0 0
        %770 = vmatprep.subr.bf16.mxu0 0
        %771 = vmatpush1.bf16.msra.mxu0 0
        %772 = vmatprep.subr.bf16.mxu0 0
        %773 = vmatpush1.bf16.msra.mxu0 0
        %774 = vmatprep.subr.bf16.mxu0 0
        %775 = vmatpush1.bf16.msra.mxu0 0
        %776 = vmatprep.subr.bf16.mxu0 0
        %777 = vmatpush1.bf16.msra.mxu0 0
        %778 = vmatprep.subr.bf16.mxu0 0
        %779 = vmatpush1.bf16.msra.mxu0 0
        %780 = vmatprep.subr.bf16.mxu0 0
        %781 = vmatpush1.bf16.msra.mxu0 0
        %782 = vmatprep.subr.bf16.mxu0 0
        %783 = vmatpush1.bf16.msra.mxu0 0
        %784 = vmatprep.mubr.bf16.mxu0 0
        %785 = vmatmul.mubr.bf16.gmra.mrb[0].mxu0 %v599
        %v786 = vpop.f32.mrb[0].mxu0
        %v787 = vadd.f32 %v738, %v786
        %v788 = vpop.f32.mrb[0].mxu0
        %v789 = vpop.f32.mrb[0].mxu0
        %v790 = vadd.f32 %v738, %v789
        %v791 = vpop.f32.mrb[0].mxu0
        %792 = vmatprep.mubr.bf16.mxu0 0
        %793 = vmatmul.mubr.bf16.gmra.mrb[0].mxu0 %v602
        %v794 = vpop.f32.mrb[0].mxu0
        %v795 = vadd.f32 %v738, %v794
        %v796 = vpop.f32.mrb[0].mxu0
        %v797 = vpop.f32.mrb[0].mxu0
        %v798 = vadd.f32 %v738, %v797
        %v799 = vpop.f32.mrb[0].mxu0
        %800 = vdwg.mxu0
        %v801 = vpack.c.bf16 %v790, %v787
        %v802 = vpack.c.bf16 %v798, %v795
        %v803 = vld [vmem:[#allocation8] sm:$0xf]
        %v804 = vld [vmem:[#allocation8 + $0x4] sm:$0xf]
        %v805 = vld [vmem:[#allocation8 + $0x8] sm:$0xf]
        %v806 = vld [vmem:[#allocation8 + $0xc] sm:$0xf]
        %vm807 = vcmask 64512
        %v809 = vsel %vm807, %v653, 0
        %v812 = vsel %vm807, %v727, 0
        %814 = vmatprep.subr.bf16.mxu0 0
        %815 = vmatpush1.bf16.xpose.msra.mxu0 %v812
        %816 = vmatprep.subr.bf16.mxu0 0
        %817 = vmatpush1.bf16.xpose.msra.mxu0 0
        %818 = vmatprep.subr.bf16.mxu0 0
        %819 = vmatpush1.bf16.xpose.msra.mxu0 0
        %820 = vmatprep.subr.bf16.mxu0 0
        %821 = vmatpush1.bf16.xpose.msra.mxu0 0
        %822 = vmatprep.subr.bf16.mxu0 0
        %823 = vmatpush1.bf16.xpose.msra.mxu0 0
        %824 = vmatprep.subr.bf16.mxu0 0
        %825 = vmatpush1.bf16.xpose.msra.mxu0 0
        %826 = vmatprep.subr.bf16.mxu0 0
        %827 = vmatpush1.bf16.xpose.msra.mxu0 0
        %828 = vmatprep.subr.bf16.mxu0 0
        %829 = vmatpush1.bf16.xpose.msra.mxu0 0
        %830 = vmatprep.subr.bf16.mxu0 0
        %831 = vmatpush1.bf16.xpose.msra.mxu0 0
        %832 = vmatprep.subr.bf16.mxu0 0
        %833 = vmatpush1.bf16.xpose.msra.mxu0 0
        %834 = vmatprep.subr.bf16.mxu0 0
        %835 = vmatpush1.bf16.xpose.msra.mxu0 0
        %836 = vmatprep.subr.bf16.mxu0 0
        %837 = vmatpush1.bf16.xpose.msra.mxu0 0
        %838 = vmatprep.subr.bf16.mxu0 0
        %839 = vmatpush1.bf16.xpose.msra.mxu0 0
        %840 = vmatprep.subr.bf16.mxu0 0
        %841 = vmatpush1.bf16.xpose.msra.mxu0 0
        %842 = vmatprep.subr.bf16.mxu0 0
        %843 = vmatpush1.bf16.xpose.msra.mxu0 0
        %844 = vmatprep.subr.bf16.mxu0 0
        %845 = vmatpush1.bf16.xpose.msra.mxu0 0
        %846 = vmatprep.mubr.bf16.mxu0 0
        %847 = vmatmul.mubr.bf16.gmra.mrb[0].mxu0 %v809
        %v848 = vpop.f32.mrb[0].mxu0
        %v849 = vadd.f32 0.0, %v848
        %v850 = vpop.f32.mrb[0].mxu0
        %v851 = vpop.f32.mrb[0].mxu0
        %v852 = vadd.f32 0.0, %v851
        %v853 = vpop.f32.mrb[0].mxu0
        %854 = vdwg.mxu0
        %v856 = vsel %vm807, %v654, 0
        %v859 = vsel %vm807, %v728, 0
        %861 = vmatprep.subr.bf16.mxu0 0
        %862 = vmatpush1.bf16.xpose.msra.mxu0 %v859
        %863 = vmatprep.subr.bf16.mxu0 0
        %864 = vmatpush1.bf16.xpose.msra.mxu0 0
        %865 = vmatprep.subr.bf16.mxu0 0
        %866 = vmatpush1.bf16.xpose.msra.mxu0 0
        %867 = vmatprep.subr.bf16.mxu0 0
        %868 = vmatpush1.bf16.xpose.msra.mxu0 0
        %869 = vmatprep.subr.bf16.mxu0 0
        %870 = vmatpush1.bf16.xpose.msra.mxu0 0
        %871 = vmatprep.subr.bf16.mxu0 0
        %872 = vmatpush1.bf16.xpose.msra.mxu0 0
        %873 = vmatprep.subr.bf16.mxu0 0
        %874 = vmatpush1.bf16.xpose.msra.mxu0 0
        %875 = vmatprep.subr.bf16.mxu0 0
        %876 = vmatpush1.bf16.xpose.msra.mxu0 0
        %877 = vmatprep.subr.bf16.mxu0 0
        %878 = vmatpush1.bf16.xpose.msra.mxu0 0
        %879 = vmatprep.subr.bf16.mxu0 0
        %880 = vmatpush1.bf16.xpose.msra.mxu0 0
        %881 = vmatprep.subr.bf16.mxu0 0
        %882 = vmatpush1.bf16.xpose.msra.mxu0 0
        %883 = vmatprep.subr.bf16.mxu0 0
        %884 = vmatpush1.bf16.xpose.msra.mxu0 0
        %885 = vmatprep.subr.bf16.mxu0 0
        %886 = vmatpush1.bf16.xpose.msra.mxu0 0
        %887 = vmatprep.subr.bf16.mxu0 0
        %888 = vmatpush1.bf16.xpose.msra.mxu0 0
        %889 = vmatprep.subr.bf16.mxu0 0
        %890 = vmatpush1.bf16.xpose.msra.mxu0 0
        %891 = vmatprep.subr.bf16.mxu0 0
        %892 = vmatpush1.bf16.xpose.msra.mxu0 0
        %893 = vmatprep.mubr.bf16.mxu0 0
        %894 = vmatmul.mubr.bf16.gmra.mrb[0].mxu0 %v856
        %v895 = vpop.f32.mrb[0].mxu0
        %v896 = vadd.f32 0.0, %v895
        %v897 = vpop.f32.mrb[0].mxu0
        %v898 = vpop.f32.mrb[0].mxu0
        %v899 = vadd.f32 0.0, %v898
        %v900 = vpop.f32.mrb[0].mxu0
        %901 = vdwg.mxu0
        %v902 = vmul.f32 %v849, 0.35355338
        %v903 = vmul.f32 %v852, 0.35355338
        %v904 = vmul.f32 %v896, 0.35355338
        %v905 = vmul.f32 %v899, 0.35355338
        %vm906 = vcmask 130048
        %v907 = vsel %vm906, %v902, -inf
        %908 = vmax.xlane.f32.xlu0 %v907
        %v909 = vpop.xlane.xlu0 %908
        %v910 = vsel %vm906, %v903, -inf
        %911 = vmax.xlane.f32.xlu0 %v910
        %v912 = vpop.xlane.xlu0 %911
        %v913 = vsel %vm906, %v904, -inf
        %914 = vmax.xlane.f32.xlu0 %v913
        %v915 = vpop.xlane.xlu0 %914
        %v916 = vsel %vm906, %v905, -inf
        %917 = vmax.xlane.f32.xlu0 %v916
        %v918 = vpop.xlane.xlu0 %917
        %v919 = vsub.f32 %v902, %v909
        %v920 = vsub.f32 %v903, %v912
        %v921 = vsub.f32 %v904, %v915
        %v922 = vsub.f32 %v905, %v918
        %v923 = vmul.f32 %v919, 1.442695
        %v924 = vpow.pop %v923
        %v925 = vmul.f32 %v920, 1.442695
        %v926 = vpow.pop %v925
        %v927 = vmul.f32 %v921, 1.442695
        %v928 = vpow.pop %v927
        %v929 = vmul.f32 %v922, 1.442695
        %v930 = vpow.pop %v929
        %v931 = vsel %vm906, %v924, 0.0
        %932 = vadd.xlane.f32.xlu0 %v931
        %v933 = vpop.xlane.xlu0 %932
        %v934 = vsel %vm906, %v926, 0.0
        %935 = vadd.xlane.f32.xlu0 %v934
        %v936 = vpop.xlane.xlu0 %935
        %v937 = vsel %vm906, %v928, 0.0
        %938 = vadd.xlane.f32.xlu0 %v937
        %v939 = vpop.xlane.xlu0 %938
        %v940 = vsel %vm906, %v930, 0.0
        %941 = vadd.xlane.f32.xlu0 %v940
        %v942 = vpop.xlane.xlu0 %941
        %v943 = vrcp.pop %v933
        %v944 = vrcp.pop %v936
        %v945 = vrcp.pop %v939
        %v946 = vrcp.pop %v942
        %v947 = vmul.f32 %v924, %v943
        %v948 = vmul.f32 %v926, %v944
        %v949 = vmul.f32 %v928, %v945
        %v950 = vmul.f32 %v930, %v946
        %v951 = vpack.c.bf16 %v948, %v947
        %v952 = vpack.c.bf16 %v950, %v949
        %v954 = vsel %vm906, %v951, 0
        %956 = vmatprep.subr.bf16.mxu0 0
        %957 = vmatpush1.bf16.msra.mxu0 %v801
        %958 = vmatprep.subr.bf16.mxu0 0
        %959 = vmatpush1.bf16.msra.mxu0 0
        %960 = vmatprep.subr.bf16.mxu0 0
        %961 = vmatpush1.bf16.msra.mxu0 0
        %962 = vmatprep.subr.bf16.mxu0 0
        %963 = vmatpush1.bf16.msra.mxu0 0
        %964 = vmatprep.subr.bf16.mxu0 0
        %965 = vmatpush1.bf16.msra.mxu0 0
        %966 = vmatprep.subr.bf16.mxu0 0
        %967 = vmatpush1.bf16.msra.mxu0 0
        %968 = vmatprep.subr.bf16.mxu0 0
        %969 = vmatpush1.bf16.msra.mxu0 0
        %970 = vmatprep.subr.bf16.mxu0 0
        %971 = vmatpush1.bf16.msra.mxu0 0
        %972 = vmatprep.subr.bf16.mxu0 0
        %973 = vmatpush1.bf16.msra.mxu0 0
        %974 = vmatprep.subr.bf16.mxu0 0
        %975 = vmatpush1.bf16.msra.mxu0 0
        %976 = vmatprep.subr.bf16.mxu0 0
        %977 = vmatpush1.bf16.msra.mxu0 0
        %978 = vmatprep.subr.bf16.mxu0 0
        %979 = vmatpush1.bf16.msra.mxu0 0
        %980 = vmatprep.subr.bf16.mxu0 0
        %981 = vmatpush1.bf16.msra.mxu0 0
        %982 = vmatprep.subr.bf16.mxu0 0
        %983 = vmatpush1.bf16.msra.mxu0 0
        %984 = vmatprep.subr.bf16.mxu0 0
        %985 = vmatpush1.bf16.msra.mxu0 0
        %986 = vmatprep.subr.bf16.mxu0 0
        %987 = vmatpush1.bf16.msra.mxu0 0
        %988 = vmatprep.mubr.bf16.mxu0 0
        %989 = vmatmul.mubr.bf16.gmra.mrb[0].mxu0 %v954
        %v990 = vpop.f32.mrb[0].mxu0
        %v991 = vadd.f32 0.0, %v990
        %v992 = vpop.f32.mrb[0].mxu0
        %v993 = vpop.f32.mrb[0].mxu0
        %v994 = vadd.f32 0.0, %v993
        %v995 = vpop.f32.mrb[0].mxu0
        %996 = vdwg.mxu0
        %v998 = vsel %vm906, %v952, 0
        %1000 = vmatprep.subr.bf16.mxu0 0
        %1001 = vmatpush1.bf16.msra.mxu0 %v802
        %1002 = vmatprep.subr.bf16.mxu0 0
        %1003 = vmatpush1.bf16.msra.mxu0 0
        %1004 = vmatprep.subr.bf16.mxu0 0
        %1005 = vmatpush1.bf16.msra.mxu0 0
        %1006 = vmatprep.subr.bf16.mxu0 0
        %1007 = vmatpush1.bf16.msra.mxu0 0
        %1008 = vmatprep.subr.bf16.mxu0 0
        %1009 = vmatpush1.bf16.msra.mxu0 0
        %1010 = vmatprep.subr.bf16.mxu0 0
        %1011 = vmatpush1.bf16.msra.mxu0 0
        %1012 = vmatprep.subr.bf16.mxu0 0
        %1013 = vmatpush1.bf16.msra.mxu0 0
        %1014 = vmatprep.subr.bf16.mxu0 0
        %1015 = vmatpush1.bf16.msra.mxu0 0
        %1016 = vmatprep.subr.bf16.mxu0 0
        %1017 = vmatpush1.bf16.msra.mxu0 0
        %1018 = vmatprep.subr.bf16.mxu0 0
        %1019 = vmatpush1.bf16.msra.mxu0 0
        %1020 = vmatprep.subr.bf16.mxu0 0
        %1021 = vmatpush1.bf16.msra.mxu0 0
        %1022 = vmatprep.subr.bf16.mxu0 0
        %1023 = vmatpush1.bf16.msra.mxu0 0
        %1024 = vmatprep.subr.bf16.mxu0 0
        %1025 = vmatpush1.bf16.msra.mxu0 0
        %1026 = vmatprep.subr.bf16.mxu0 0
        %1027 = vmatpush1.bf16.msra.mxu0 0
        %1028 = vmatprep.subr.bf16.mxu0 0
        %1029 = vmatpush1.bf16.msra.mxu0 0
        %1030 = vmatprep.subr.bf16.mxu0 0
        %1031 = vmatpush1.bf16.msra.mxu0 0
        %1032 = vmatprep.mubr.bf16.mxu0 0
        %1033 = vmatmul.mubr.bf16.gmra.mrb[0].mxu0 %v998
        %v1034 = vpop.f32.mrb[0].mxu0
        %v1035 = vadd.f32 0.0, %v1034
        %v1036 = vpop.f32.mrb[0].mxu0
        %v1037 = vpop.f32.mrb[0].mxu0
        %v1038 = vadd.f32 0.0, %v1037
        %v1039 = vpop.f32.mrb[0].mxu0
        %1040 = vdwg.mxu0
        %v1041 = vpack.c.bf16 %v994, %v991
        %v1042 = vpack.c.bf16 %v1038, %v1035
        %1044 = vrot.lane.b32.xlu0 %v653, 120
        %v1045 = vpop.permute.xlu0 %1044
        %1047 = vrot.lane.b32.xlu0 %v727, 120
        %v1048 = vpop.permute.xlu0 %1047
        %v1050 = vsel %vm807, %v1045, 0
        %v1053 = vsel %vm807, %v1048, 0
        %1055 = vmatprep.subr.bf16.mxu0 0
        %1056 = vmatpush1.bf16.xpose.msra.mxu0 %v1053
        %1057 = vmatprep.subr.bf16.mxu0 0
        %1058 = vmatpush1.bf16.xpose.msra.mxu0 0
        %1059 = vmatprep.subr.bf16.mxu0 0
        %1060 = vmatpush1.bf16.xpose.msra.mxu0 0
        %1061 = vmatprep.subr.bf16.mxu0 0
        %1062 = vmatpush1.bf16.xpose.msra.mxu0 0
        %1063 = vmatprep.subr.bf16.mxu0 0
        %1064 = vmatpush1.bf16.xpose.msra.mxu0 0
        %1065 = vmatprep.subr.bf16.mxu0 0
        %1066 = vmatpush1.bf16.xpose.msra.mxu0 0
        %1067 = vmatprep.subr.bf16.mxu0 0
        %1068 = vmatpush1.bf16.xpose.msra.mxu0 0
        %1069 = vmatprep.subr.bf16.mxu0 0
        %1070 = vmatpush1.bf16.xpose.msra.mxu0 0
        %1071 = vmatprep.subr.bf16.mxu0 0
        %1072 = vmatpush1.bf16.xpose.msra.mxu0 0
        %1073 = vmatprep.subr.bf16.mxu0 0
        %1074 = vmatpush1.bf16.xpose.msra.mxu0 0
        %1075 = vmatprep.subr.bf16.mxu0 0
        %1076 = vmatpush1.bf16.xpose.msra.mxu0 0
        %1077 = vmatprep.subr.bf16.mxu0 0
        %1078 = vmatpush1.bf16.xpose.msra.mxu0 0
        %1079 = vmatprep.subr.bf16.mxu0 0
        %1080 = vmatpush1.bf16.xpose.msra.mxu0 0
        %1081 = vmatprep.subr.bf16.mxu0 0
        %1082 = vmatpush1.bf16.xpose.msra.mxu0 0
        %1083 = vmatprep.subr.bf16.mxu0 0
        %1084 = vmatpush1.bf16.xpose.msra.mxu0 0
        %1085 = vmatprep.subr.bf16.mxu0 0
        %1086 = vmatpush1.bf16.xpose.msra.mxu0 0
        %1087 = vmatprep.mubr.bf16.mxu0 0
        %1088 = vmatmul.mubr.bf16.gmra.mrb[0].mxu0 %v1050
        %v1089 = vpop.f32.mrb[0].mxu0
        %v1090 = vadd.f32 0.0, %v1089
        %v1091 = vpop.f32.mrb[0].mxu0
        %v1092 = vpop.f32.mrb[0].mxu0
        %v1093 = vadd.f32 0.0, %v1092
        %v1094 = vpop.f32.mrb[0].mxu0
        %1095 = vdwg.mxu0
        %1097 = vrot.lane.b32.xlu0 %v654, 120
        %v1098 = vpop.permute.xlu0 %1097
        %1100 = vrot.lane.b32.xlu0 %v728, 120
        %v1101 = vpop.permute.xlu0 %1100
        %v1103 = vsel %vm807, %v1098, 0
        %v1106 = vsel %vm807, %v1101, 0
        %1108 = vmatprep.subr.bf16.mxu0 0
        %1109 = vmatpush1.bf16.xpose.msra.mxu0 %v1106
        %1110 = vmatprep.subr.bf16.mxu0 0
        %1111 = vmatpush1.bf16.xpose.msra.mxu0 0
        %1112 = vmatprep.subr.bf16.mxu0 0
        %1113 = vmatpush1.bf16.xpose.msra.mxu0 0
        %1114 = vmatprep.subr.bf16.mxu0 0
        %1115 = vmatpush1.bf16.xpose.msra.mxu0 0
        %1116 = vmatprep.subr.bf16.mxu0 0
        %1117 = vmatpush1.bf16.xpose.msra.mxu0 0
        %1118 = vmatprep.subr.bf16.mxu0 0
        %1119 = vmatpush1.bf16.xpose.msra.mxu0 0
        %1120 = vmatprep.subr.bf16.mxu0 0
        %1121 = vmatpush1.bf16.xpose.msra.mxu0 0
        %1122 = vmatprep.subr.bf16.mxu0 0
        %1123 = vmatpush1.bf16.xpose.msra.mxu0 0
        %1124 = vmatprep.subr.bf16.mxu0 0
        %1125 = vmatpush1.bf16.xpose.msra.mxu0 0
        %1126 = vmatprep.subr.bf16.mxu0 0
        %1127 = vmatpush1.bf16.xpose.msra.mxu0 0
        %1128 = vmatprep.subr.bf16.mxu0 0
        %1129 = vmatpush1.bf16.xpose.msra.mxu0 0
        %1130 = vmatprep.subr.bf16.mxu0 0
        %1131 = vmatpush1.bf16.xpose.msra.mxu0 0
        %1132 = vmatprep.subr.bf16.mxu0 0
        %1133 = vmatpush1.bf16.xpose.msra.mxu0 0
        %1134 = vmatprep.subr.bf16.mxu0 0
        %1135 = vmatpush1.bf16.xpose.msra.mxu0 0
        %1136 = vmatprep.subr.bf16.mxu0 0
        %1137 = vmatpush1.bf16.xpose.msra.mxu0 0
        %1138 = vmatprep.subr.bf16.mxu0 0
        %1139 = vmatpush1.bf16.xpose.msra.mxu0 0
        %1140 = vmatprep.mubr.bf16.mxu0 0
        %1141 = vmatmul.mubr.bf16.gmra.mrb[0].mxu0 %v1103
        %v1142 = vpop.f32.mrb[0].mxu0
        %v1143 = vadd.f32 0.0, %v1142
        %v1144 = vpop.f32.mrb[0].mxu0
        %v1145 = vpop.f32.mrb[0].mxu0
        %v1146 = vadd.f32 0.0, %v1145
        %v1147 = vpop.f32.mrb[0].mxu0
        %1148 = vdwg.mxu0
        %v1149 = vmul.f32 %v1090, 0.35355338
        %v1150 = vmul.f32 %v1093, 0.35355338
        %v1151 = vmul.f32 %v1143, 0.35355338
        %v1152 = vmul.f32 %v1146, 0.35355338
        %v1153 = vsel %vm906, %v1149, -inf
        %1154 = vmax.xlane.f32.xlu0 %v1153
        %v1155 = vpop.xlane.xlu0 %1154
        %v1156 = vsel %vm906, %v1150, -inf
        %1157 = vmax.xlane.f32.xlu0 %v1156
        %v1158 = vpop.xlane.xlu0 %1157
        %v1159 = vsel %vm906, %v1151, -inf
        %1160 = vmax.xlane.f32.xlu0 %v1159
        %v1161 = vpop.xlane.xlu0 %1160
        %v1162 = vsel %vm906, %v1152, -inf
        %1163 = vmax.xlane.f32.xlu0 %v1162
        %v1164 = vpop.xlane.xlu0 %1163
        %v1165 = vsub.f32 %v1149, %v1155
        %v1166 = vsub.f32 %v1150, %v1158
        %v1167 = vsub.f32 %v1151, %v1161
        %v1168 = vsub.f32 %v1152, %v1164
        %v1169 = vmul.f32 %v1165, 1.442695
        %v1170 = vpow.pop %v1169
        %v1171 = vmul.f32 %v1166, 1.442695
        %v1172 = vpow.pop %v1171
        %v1173 = vmul.f32 %v1167, 1.442695
        %v1174 = vpow.pop %v1173
        %v1175 = vmul.f32 %v1168, 1.442695
        %v1176 = vpow.pop %v1175
        %v1177 = vsel %vm906, %v1170, 0.0
        %1178 = vadd.xlane.f32.xlu0 %v1177
        %v1179 = vpop.xlane.xlu0 %1178
        %v1180 = vsel %vm906, %v1172, 0.0
        %1181 = vadd.xlane.f32.xlu0 %v1180
        %v1182 = vpop.xlane.xlu0 %1181
        %v1183 = vsel %vm906, %v1174, 0.0
        %1184 = vadd.xlane.f32.xlu0 %v1183
        %v1185 = vpop.xlane.xlu0 %1184
        %v1186 = vsel %vm906, %v1176, 0.0
        %1187 = vadd.xlane.f32.xlu0 %v1186
        %v1188 = vpop.xlane.xlu0 %1187
        %v1189 = vrcp.pop %v1179
        %v1190 = vrcp.pop %v1182
        %v1191 = vrcp.pop %v1185
        %v1192 = vrcp.pop %v1188
        %v1193 = vmul.f32 %v1170, %v1189
        %v1194 = vmul.f32 %v1172, %v1190
        %v1195 = vmul.f32 %v1174, %v1191
        %v1196 = vmul.f32 %v1176, %v1192
        %v1197 = vpack.c.bf16 %v1194, %v1193
        %v1198 = vpack.c.bf16 %v1196, %v1195
        %1200 = vrot.lane.b32.xlu0 %v801, 120
        %v1201 = vpop.permute.xlu0 %1200
        %v1204 = vsel %vm906, %v1197, 0
        %1206 = vmatprep.subr.bf16.mxu0 0
        %1207 = vmatpush1.bf16.msra.mxu0 %v1201
        %1208 = vmatprep.subr.bf16.mxu0 0
        %1209 = vmatpush1.bf16.msra.mxu0 0
        %1210 = vmatprep.subr.bf16.mxu0 0
        %1211 = vmatpush1.bf16.msra.mxu0 0
        %1212 = vmatprep.subr.bf16.mxu0 0
        %1213 = vmatpush1.bf16.msra.mxu0 0
        %1214 = vmatprep.subr.bf16.mxu0 0
        %1215 = vmatpush1.bf16.msra.mxu0 0
        %1216 = vmatprep.subr.bf16.mxu0 0
        %1217 = vmatpush1.bf16.msra.mxu0 0
        %1218 = vmatprep.subr.bf16.mxu0 0
        %1219 = vmatpush1.bf16.msra.mxu0 0
        %1220 = vmatprep.subr.bf16.mxu0 0
        %1221 = vmatpush1.bf16.msra.mxu0 0
        %1222 = vmatprep.subr.bf16.mxu0 0
        %1223 = vmatpush1.bf16.msra.mxu0 0
        %1224 = vmatprep.subr.bf16.mxu0 0
        %1225 = vmatpush1.bf16.msra.mxu0 0
        %1226 = vmatprep.subr.bf16.mxu0 0
        %1227 = vmatpush1.bf16.msra.mxu0 0
        %1228 = vmatprep.subr.bf16.mxu0 0
        %1229 = vmatpush1.bf16.msra.mxu0 0
        %1230 = vmatprep.subr.bf16.mxu0 0
        %1231 = vmatpush1.bf16.msra.mxu0 0
        %1232 = vmatprep.subr.bf16.mxu0 0
        %1233 = vmatpush1.bf16.msra.mxu0 0
        %1234 = vmatprep.subr.bf16.mxu0 0
        %1235 = vmatpush1.bf16.msra.mxu0 0
        %1236 = vmatprep.subr.bf16.mxu0 0
        %1237 = vmatpush1.bf16.msra.mxu0 0
        %1238 = vmatprep.mubr.bf16.mxu0 0
        %1239 = vmatmul.mubr.bf16.gmra.mrb[0].mxu0 %v1204
        %v1240 = vpop.f32.mrb[0].mxu0
        %v1241 = vadd.f32 0.0, %v1240
        %v1242 = vpop.f32.mrb[0].mxu0
        %v1243 = vpop.f32.mrb[0].mxu0
        %v1244 = vadd.f32 0.0, %v1243
        %v1245 = vpop.f32.mrb[0].mxu0
        %1246 = vdwg.mxu0
        %1248 = vrot.lane.b32.xlu0 %v802, 120
        %v1249 = vpop.permute.xlu0 %1248
        %v1252 = vsel %vm906, %v1198, 0
        %1254 = vmatprep.subr.bf16.mxu0 0
        %1255 = vmatpush1.bf16.msra.mxu0 %v1249
        %1256 = vmatprep.subr.bf16.mxu0 0
        %1257 = vmatpush1.bf16.msra.mxu0 0
        %1258 = vmatprep.subr.bf16.mxu0 0
        %1259 = vmatpush1.bf16.msra.mxu0 0
        %1260 = vmatprep.subr.bf16.mxu0 0
        %1261 = vmatpush1.bf16.msra.mxu0 0
        %1262 = vmatprep.subr.bf16.mxu0 0
        %1263 = vmatpush1.bf16.msra.mxu0 0
        %1264 = vmatprep.subr.bf16.mxu0 0
        %1265 = vmatpush1.bf16.msra.mxu0 0
        %1266 = vmatprep.subr.bf16.mxu0 0
        %1267 = vmatpush1.bf16.msra.mxu0 0
        %1268 = vmatprep.subr.bf16.mxu0 0
        %1269 = vmatpush1.bf16.msra.mxu0 0
        %1270 = vmatprep.subr.bf16.mxu0 0
        %1271 = vmatpush1.bf16.msra.mxu0 0
        %1272 = vmatprep.subr.bf16.mxu0 0
        %1273 = vmatpush1.bf16.msra.mxu0 0
        %1274 = vmatprep.subr.bf16.mxu0 0
        %1275 = vmatpush1.bf16.msra.mxu0 0
        %1276 = vmatprep.subr.bf16.mxu0 0
        %1277 = vmatpush1.bf16.msra.mxu0 0
        %1278 = vmatprep.subr.bf16.mxu0 0
        %1279 = vmatpush1.bf16.msra.mxu0 0
        %1280 = vmatprep.subr.bf16.mxu0 0
        %1281 = vmatpush1.bf16.msra.mxu0 0
        %1282 = vmatprep.subr.bf16.mxu0 0
        %1283 = vmatpush1.bf16.msra.mxu0 0
        %1284 = vmatprep.subr.bf16.mxu0 0
        %1285 = vmatpush1.bf16.msra.mxu0 0
        %1286 = vmatprep.mubr.bf16.mxu0 0
        %1287 = vmatmul.mubr.bf16.gmra.mrb[0].mxu0 %v1252
        %v1288 = vpop.f32.mrb[0].mxu0
        %v1289 = vadd.f32 0.0, %v1288
        %v1290 = vpop.f32.mrb[0].mxu0
        %v1291 = vpop.f32.mrb[0].mxu0
        %v1292 = vadd.f32 0.0, %v1291
        %v1293 = vpop.f32.mrb[0].mxu0
        %1294 = vdwg.mxu0
        %v1295 = vpack.c.bf16 %v1244, %v1241
        %v1296 = vpack.c.bf16 %v1292, %v1289
        %v1298 = vsel %vm807, %v1295, 0
        %v1301 = vsel %vm807, %v1296, 0
        %vm1303 = vcmask 1043456
        %v1305 = vsel %vm1303, %v804, 0
        %1307 = vmatprep.subr.bf16.mxu0 0
        %1308 = vmatpush1.bf16.msra.mxu0 %v1305
        %1309 = vmatprep.subr.bf16.mxu0 0
        %1310 = vmatpush1.bf16.msra.mxu0 0
        %1311 = vmatprep.subr.bf16.mxu0 0
        %1312 = vmatpush1.bf16.msra.mxu0 0
        %1313 = vmatprep.subr.bf16.mxu0 0
        %1314 = vmatpush1.bf16.msra.mxu0 0
        %1315 = vmatprep.subr.bf16.mxu0 0
        %1316 = vmatpush1.bf16.msra.mxu0 0
        %1317 = vmatprep.subr.bf16.mxu0 0
        %1318 = vmatpush1.bf16.msra.mxu0 0
        %1319 = vmatprep.subr.bf16.mxu0 0
        %1320 = vmatpush1.bf16.msra.mxu0 0
        %1321 = vmatprep.subr.bf16.mxu0 0
        %1322 = vmatpush1.bf16.msra.mxu0 0
        %1323 = vmatprep.subr.bf16.mxu0 0
        %1324 = vmatpush1.bf16.msra.mxu0 0
        %1325 = vmatprep.subr.bf16.mxu0 0
        %1326 = vmatpush1.bf16.msra.mxu0 0
        %1327 = vmatprep.subr.bf16.mxu0 0
        %1328 = vmatpush1.bf16.msra.mxu0 0
        %1329 = vmatprep.subr.bf16.mxu0 0
        %1330 = vmatpush1.bf16.msra.mxu0 0
        %1331 = vmatprep.subr.bf16.mxu0 0
        %1332 = vmatpush1.bf16.msra.mxu0 0
        %1333 = vmatprep.subr.bf16.mxu0 0
        %1334 = vmatpush1.bf16.msra.mxu0 0
        %1335 = vmatprep.subr.bf16.mxu0 0
        %1336 = vmatpush1.bf16.msra.mxu0 0
        %1337 = vmatprep.subr.bf16.mxu0 0
        %1338 = vmatpush1.bf16.msra.mxu0 0
        %1339 = vmatprep.mubr.bf16.mxu0 0
        %1340 = vmatmul.mubr.bf16.gmra.mrb[0].mxu0 %v1298
        %v1341 = vpop.f32.mrb[0].mxu0
        %v1342 = vadd.f32 0.0, %v1341
        %v1343 = vpop.f32.mrb[0].mxu0
        %v1344 = vpop.f32.mrb[0].mxu0
        %v1345 = vadd.f32 0.0, %v1344
        %v1346 = vpop.f32.mrb[0].mxu0
        %1347 = vmatprep.mubr.bf16.mxu0 0
        %1348 = vmatmul.mubr.bf16.gmra.mrb[0].mxu0 %v1301
        %v1349 = vpop.f32.mrb[0].mxu0
        %v1350 = vadd.f32 0.0, %v1349
        %v1351 = vpop.f32.mrb[0].mxu0
        %v1352 = vpop.f32.mrb[0].mxu0
        %v1353 = vadd.f32 0.0, %v1352
        %v1354 = vpop.f32.mrb[0].mxu0
        %1355 = vdwg.mxu0
        %v1357 = vsel %vm807, %v1041, 0
        %v1360 = vsel %vm807, %v1042, 0
        %v1363 = vsel %vm1303, %v803, 0
        %1365 = vmatprep.subr.bf16.mxu0 0
        %1366 = vmatpush1.bf16.msra.mxu0 %v1363
        %1367 = vmatprep.subr.bf16.mxu0 0
        %1368 = vmatpush1.bf16.msra.mxu0 0
        %1369 = vmatprep.subr.bf16.mxu0 0
        %1370 = vmatpush1.bf16.msra.mxu0 0
        %1371 = vmatprep.subr.bf16.mxu0 0
        %1372 = vmatpush1.bf16.msra.mxu0 0
        %1373 = vmatprep.subr.bf16.mxu0 0
        %1374 = vmatpush1.bf16.msra.mxu0 0
        %1375 = vmatprep.subr.bf16.mxu0 0
        %1376 = vmatpush1.bf16.msra.mxu0 0
        %1377 = vmatprep.subr.bf16.mxu0 0
        %1378 = vmatpush1.bf16.msra.mxu0 0
        %1379 = vmatprep.subr.bf16.mxu0 0
        %1380 = vmatpush1.bf16.msra.mxu0 0
        %1381 = vmatprep.subr.bf16.mxu0 0
        %1382 = vmatpush1.bf16.msra.mxu0 0
        %1383 = vmatprep.subr.bf16.mxu0 0
        %1384 = vmatpush1.bf16.msra.mxu0 0
        %1385 = vmatprep.subr.bf16.mxu0 0
        %1386 = vmatpush1.bf16.msra.mxu0 0
        %1387 = vmatprep.subr.bf16.mxu0 0
        %1388 = vmatpush1.bf16.msra.mxu0 0
        %1389 = vmatprep.subr.bf16.mxu0 0
        %1390 = vmatpush1.bf16.msra.mxu0 0
        %1391 = vmatprep.subr.bf16.mxu0 0
        %1392 = vmatpush1.bf16.msra.mxu0 0
        %1393 = vmatprep.subr.bf16.mxu0 0
        %1394 = vmatpush1.bf16.msra.mxu0 0
        %1395 = vmatprep.subr.bf16.mxu0 0
        %1396 = vmatpush1.bf16.msra.mxu0 0
        %1397 = vmatprep.mubr.bf16.mxu0 0
        %1398 = vmatmul.mubr.bf16.gmra.mrb[0].mxu0 %v1357
        %v1399 = vpop.f32.mrb[0].mxu0
        %v1400 = vadd.f32 %v1342, %v1399
        %v1401 = vpop.f32.mrb[0].mxu0
        %v1402 = vpop.f32.mrb[0].mxu0
        %v1403 = vadd.f32 %v1345, %v1402
        %v1404 = vpop.f32.mrb[0].mxu0
        %1405 = vmatprep.mubr.bf16.mxu0 0
        %1406 = vmatmul.mubr.bf16.gmra.mrb[0].mxu0 %v1360
        %v1407 = vpop.f32.mrb[0].mxu0
        %v1408 = vadd.f32 %v1350, %v1407
        %v1409 = vpop.f32.mrb[0].mxu0
        %v1410 = vpop.f32.mrb[0].mxu0
        %v1411 = vadd.f32 %v1353, %v1410
        %v1412 = vpop.f32.mrb[0].mxu0
        %1413 = vdwg.mxu0
        %1414 = vrot.lane.b32.xlu0 %v653, 112
        %v1415 = vpop.permute.xlu0 %1414
        %1416 = vrot.lane.b32.xlu0 %v727, 112
        %v1417 = vpop.permute.xlu0 %1416
        %v1419 = vsel %vm807, %v1415, 0
        %v1422 = vsel %vm807, %v1417, 0
        %1424 = vmatprep.subr.bf16.mxu0 0
        %1425 = vmatpush1.bf16.xpose.msra.mxu0 %v1422
        %1426 = vmatprep.subr.bf16.mxu0 0
        %1427 = vmatpush1.bf16.xpose.msra.mxu0 0
        %1428 = vmatprep.subr.bf16.mxu0 0
        %1429 = vmatpush1.bf16.xpose.msra.mxu0 0
        %1430 = vmatprep.subr.bf16.mxu0 0
        %1431 = vmatpush1.bf16.xpose.msra.mxu0 0
        %1432 = vmatprep.subr.bf16.mxu0 0
        %1433 = vmatpush1.bf16.xpose.msra.mxu0 0
        %1434 = vmatprep.subr.bf16.mxu0 0
        %1435 = vmatpush1.bf16.xpose.msra.mxu0 0
        %1436 = vmatprep.subr.bf16.mxu0 0
        %1437 = vmatpush1.bf16.xpose.msra.mxu0 0
        %1438 = vmatprep.subr.bf16.mxu0 0
        %1439 = vmatpush1.bf16.xpose.msra.mxu0 0
        %1440 = vmatprep.subr.bf16.mxu0 0
        %1441 = vmatpush1.bf16.xpose.msra.mxu0 0
        %1442 = vmatprep.subr.bf16.mxu0 0
        %1443 = vmatpush1.bf16.xpose.msra.mxu0 0
        %1444 = vmatprep.subr.bf16.mxu0 0
        %1445 = vmatpush1.bf16.xpose.msra.mxu0 0
        %1446 = vmatprep.subr.bf16.mxu0 0
        %1447 = vmatpush1.bf16.xpose.msra.mxu0 0
        %1448 = vmatprep.subr.bf16.mxu0 0
        %1449 = vmatpush1.bf16.xpose.msra.mxu0 0
        %1450 = vmatprep.subr.bf16.mxu0 0
        %1451 = vmatpush1.bf16.xpose.msra.mxu0 0
        %1452 = vmatprep.subr.bf16.mxu0 0
        %1453 = vmatpush1.bf16.xpose.msra.mxu0 0
        %1454 = vmatprep.subr.bf16.mxu0 0
        %1455 = vmatpush1.bf16.xpose.msra.mxu0 0
        %1456 = vmatprep.mubr.bf16.mxu0 0
        %1457 = vmatmul.mubr.bf16.gmra.mrb[0].mxu0 %v1419
        %v1458 = vpop.f32.mrb[0].mxu0
        %v1459 = vadd.f32 0.0, %v1458
        %v1460 = vpop.f32.mrb[0].mxu0
        %v1461 = vpop.f32.mrb[0].mxu0
        %v1462 = vadd.f32 0.0, %v1461
        %v1463 = vpop.f32.mrb[0].mxu0
        %1464 = vdwg.mxu0
        %1465 = vrot.lane.b32.xlu0 %v654, 112
        %v1466 = vpop.permute.xlu0 %1465
        %1467 = vrot.lane.b32.xlu0 %v728, 112
        %v1468 = vpop.permute.xlu0 %1467
        %v1470 = vsel %vm807, %v1466, 0
        %v1473 = vsel %vm807, %v1468, 0
        %1475 = vmatprep.subr.bf16.mxu0 0
        %1476 = vmatpush1.bf16.xpose.msra.mxu0 %v1473
        %1477 = vmatprep.subr.bf16.mxu0 0
        %1478 = vmatpush1.bf16.xpose.msra.mxu0 0
        %1479 = vmatprep.subr.bf16.mxu0 0
        %1480 = vmatpush1.bf16.xpose.msra.mxu0 0
        %1481 = vmatprep.subr.bf16.mxu0 0
        %1482 = vmatpush1.bf16.xpose.msra.mxu0 0
        %1483 = vmatprep.subr.bf16.mxu0 0
        %1484 = vmatpush1.bf16.xpose.msra.mxu0 0
        %1485 = vmatprep.subr.bf16.mxu0 0
        %1486 = vmatpush1.bf16.xpose.msra.mxu0 0
        %1487 = vmatprep.subr.bf16.mxu0 0
        %1488 = vmatpush1.bf16.xpose.msra.mxu0 0
        %1489 = vmatprep.subr.bf16.mxu0 0
        %1490 = vmatpush1.bf16.xpose.msra.mxu0 0
        %1491 = vmatprep.subr.bf16.mxu0 0
        %1492 = vmatpush1.bf16.xpose.msra.mxu0 0
        %1493 = vmatprep.subr.bf16.mxu0 0
        %1494 = vmatpush1.bf16.xpose.msra.mxu0 0
        %1495 = vmatprep.subr.bf16.mxu0 0
        %1496 = vmatpush1.bf16.xpose.msra.mxu0 0
        %1497 = vmatprep.subr.bf16.mxu0 0
        %1498 = vmatpush1.bf16.xpose.msra.mxu0 0
        %1499 = vmatprep.subr.bf16.mxu0 0
        %1500 = vmatpush1.bf16.xpose.msra.mxu0 0
        %1501 = vmatprep.subr.bf16.mxu0 0
        %1502 = vmatpush1.bf16.xpose.msra.mxu0 0
        %1503 = vmatprep.subr.bf16.mxu0 0
        %1504 = vmatpush1.bf16.xpose.msra.mxu0 0
        %1505 = vmatprep.subr.bf16.mxu0 0
        %1506 = vmatpush1.bf16.xpose.msra.mxu0 0
        %1507 = vmatprep.mubr.bf16.mxu0 0
        %1508 = vmatmul.mubr.bf16.gmra.mrb[0].mxu0 %v1470
        %v1509 = vpop.f32.mrb[0].mxu0
        %v1510 = vadd.f32 0.0, %v1509
        %v1511 = vpop.f32.mrb[0].mxu0
        %v1512 = vpop.f32.mrb[0].mxu0
        %v1513 = vadd.f32 0.0, %v1512
        %v1514 = vpop.f32.mrb[0].mxu0
        %1515 = vdwg.mxu0
        %v1516 = vmul.f32 %v1459, 0.35355338
        %v1517 = vmul.f32 %v1462, 0.35355338
        %v1518 = vmul.f32 %v1510, 0.35355338
        %v1519 = vmul.f32 %v1513, 0.35355338
        %v1520 = vsel %vm906, %v1516, -inf
        %1521 = vmax.xlane.f32.xlu0 %v1520
        %v1522 = vpop.xlane.xlu0 %1521
        %v1523 = vsel %vm906, %v1517, -inf
        %1524 = vmax.xlane.f32.xlu0 %v1523
        %v1525 = vpop.xlane.xlu0 %1524
        %v1526 = vsel %vm906, %v1518, -inf
        %1527 = vmax.xlane.f32.xlu0 %v1526
        %v1528 = vpop.xlane.xlu0 %1527
        %v1529 = vsel %vm906, %v1519, -inf
        %1530 = vmax.xlane.f32.xlu0 %v1529
        %v1531 = vpop.xlane.xlu0 %1530
        %v1532 = vsub.f32 %v1516, %v1522
        %v1533 = vsub.f32 %v1517, %v1525
        %v1534 = vsub.f32 %v1518, %v1528
        %v1535 = vsub.f32 %v1519, %v1531
        %v1536 = vmul.f32 %v1532, 1.442695
        %v1537 = vpow.pop %v1536
        %v1538 = vmul.f32 %v1533, 1.442695
        %v1539 = vpow.pop %v1538
        %v1540 = vmul.f32 %v1534, 1.442695
        %v1541 = vpow.pop %v1540
        %v1542 = vmul.f32 %v1535, 1.442695
        %v1543 = vpow.pop %v1542
        %v1544 = vsel %vm906, %v1537, 0.0
        %1545 = vadd.xlane.f32.xlu0 %v1544
        %v1546 = vpop.xlane.xlu0 %1545
        %v1547 = vsel %vm906, %v1539, 0.0
        %1548 = vadd.xlane.f32.xlu0 %v1547
        %v1549 = vpop.xlane.xlu0 %1548
        %v1550 = vsel %vm906, %v1541, 0.0
        %1551 = vadd.xlane.f32.xlu0 %v1550
        %v1552 = vpop.xlane.xlu0 %1551
        %v1553 = vsel %vm906, %v1543, 0.0
        %1554 = vadd.xlane.f32.xlu0 %v1553
        %v1555 = vpop.xlane.xlu0 %1554
        %v1556 = vrcp.pop %v1546
        %v1557 = vrcp.pop %v1549
        %v1558 = vrcp.pop %v1552
        %v1559 = vrcp.pop %v1555
        %v1560 = vmul.f32 %v1537, %v1556
        %v1561 = vmul.f32 %v1539, %v1557
        %v1562 = vmul.f32 %v1541, %v1558
        %v1563 = vmul.f32 %v1543, %v1559
        %v1564 = vpack.c.bf16 %v1561, %v1560
        %v1565 = vpack.c.bf16 %v1563, %v1562
        %1566 = vrot.lane.b32.xlu0 %v801, 112
        %v1567 = vpop.permute.xlu0 %1566
        %v1570 = vsel %vm906, %v1564, 0
        %1572 = vmatprep.subr.bf16.mxu0 0
        %1573 = vmatpush1.bf16.msra.mxu0 %v1567
        %1574 = vmatprep.subr.bf16.mxu0 0
        %1575 = vmatpush1.bf16.msra.mxu0 0
        %1576 = vmatprep.subr.bf16.mxu0 0
        %1577 = vmatpush1.bf16.msra.mxu0 0
        %1578 = vmatprep.subr.bf16.mxu0 0
        %1579 = vmatpush1.bf16.msra.mxu0 0
        %1580 = vmatprep.subr.bf16.mxu0 0
        %1581 = vmatpush1.bf16.msra.mxu0 0
        %1582 = vmatprep.subr.bf16.mxu0 0
        %1583 = vmatpush1.bf16.msra.mxu0 0
        %1584 = vmatprep.subr.bf16.mxu0 0
        %1585 = vmatpush1.bf16.msra.mxu0 0
        %1586 = vmatprep.subr.bf16.mxu0 0
        %1587 = vmatpush1.bf16.msra.mxu0 0
        %1588 = vmatprep.subr.bf16.mxu0 0
        %1589 = vmatpush1.bf16.msra.mxu0 0
        %1590 = vmatprep.subr.bf16.mxu0 0
        %1591 = vmatpush1.bf16.msra.mxu0 0
        %1592 = vmatprep.subr.bf16.mxu0 0
        %1593 = vmatpush1.bf16.msra.mxu0 0
        %1594 = vmatprep.subr.bf16.mxu0 0
        %1595 = vmatpush1.bf16.msra.mxu0 0
        %1596 = vmatprep.subr.bf16.mxu0 0
        %1597 = vmatpush1.bf16.msra.mxu0 0
        %1598 = vmatprep.subr.bf16.mxu0 0
        %1599 = vmatpush1.bf16.msra.mxu0 0
        %1600 = vmatprep.subr.bf16.mxu0 0
        %1601 = vmatpush1.bf16.msra.mxu0 0
        %1602 = vmatprep.subr.bf16.mxu0 0
        %1603 = vmatpush1.bf16.msra.mxu0 0
        %1604 = vmatprep.mubr.bf16.mxu0 0
        %1605 = vmatmul.mubr.bf16.gmra.mrb[0].mxu0 %v1570
        %v1606 = vpop.f32.mrb[0].mxu0
        %v1607 = vadd.f32 0.0, %v1606
        %v1608 = vpop.f32.mrb[0].mxu0
        %v1609 = vpop.f32.mrb[0].mxu0
        %v1610 = vadd.f32 0.0, %v1609
        %v1611 = vpop.f32.mrb[0].mxu0
        %1612 = vdwg.mxu0
        %1613 = vrot.lane.b32.xlu0 %v802, 112
        %v1614 = vpop.permute.xlu0 %1613
        %v1617 = vsel %vm906, %v1565, 0
        %1619 = vmatprep.subr.bf16.mxu0 0
        %1620 = vmatpush1.bf16.msra.mxu0 %v1614
        %1621 = vmatprep.subr.bf16.mxu0 0
        %1622 = vmatpush1.bf16.msra.mxu0 0
        %1623 = vmatprep.subr.bf16.mxu0 0
        %1624 = vmatpush1.bf16.msra.mxu0 0
        %1625 = vmatprep.subr.bf16.mxu0 0
        %1626 = vmatpush1.bf16.msra.mxu0 0
        %1627 = vmatprep.subr.bf16.mxu0 0
        %1628 = vmatpush1.bf16.msra.mxu0 0
        %1629 = vmatprep.subr.bf16.mxu0 0
        %1630 = vmatpush1.bf16.msra.mxu0 0
        %1631 = vmatprep.subr.bf16.mxu0 0
        %1632 = vmatpush1.bf16.msra.mxu0 0
        %1633 = vmatprep.subr.bf16.mxu0 0
        %1634 = vmatpush1.bf16.msra.mxu0 0
        %1635 = vmatprep.subr.bf16.mxu0 0
        %1636 = vmatpush1.bf16.msra.mxu0 0
        %1637 = vmatprep.subr.bf16.mxu0 0
        %1638 = vmatpush1.bf16.msra.mxu0 0
        %1639 = vmatprep.subr.bf16.mxu0 0
        %1640 = vmatpush1.bf16.msra.mxu0 0
        %1641 = vmatprep.subr.bf16.mxu0 0
        %1642 = vmatpush1.bf16.msra.mxu0 0
        %1643 = vmatprep.subr.bf16.mxu0 0
        %1644 = vmatpush1.bf16.msra.mxu0 0
        %1645 = vmatprep.subr.bf16.mxu0 0
        %1646 = vmatpush1.bf16.msra.mxu0 0
        %1647 = vmatprep.subr.bf16.mxu0 0
        %1648 = vmatpush1.bf16.msra.mxu0 0
        %1649 = vmatprep.subr.bf16.mxu0 0
        %1650 = vmatpush1.bf16.msra.mxu0 0
        %1651 = vmatprep.mubr.bf16.mxu0 0
        %1652 = vmatmul.mubr.bf16.gmra.mrb[0].mxu0 %v1617
        %v1653 = vpop.f32.mrb[0].mxu0
        %v1654 = vadd.f32 0.0, %v1653
        %v1655 = vpop.f32.mrb[0].mxu0
        %v1656 = vpop.f32.mrb[0].mxu0
        %v1657 = vadd.f32 0.0, %v1656
        %v1658 = vpop.f32.mrb[0].mxu0
        %1659 = vdwg.mxu0
        %v1660 = vpack.c.bf16 %v1610, %v1607
        %v1661 = vpack.c.bf16 %v1657, %v1654
        %v1663 = vsel %vm807, %v1660, 0
        %v1666 = vsel %vm807, %v1661, 0
        %v1669 = vsel %vm1303, %v805, 0
        %1671 = vmatprep.subr.bf16.mxu0 0
        %1672 = vmatpush1.bf16.msra.mxu0 %v1669
        %1673 = vmatprep.subr.bf16.mxu0 0
        %1674 = vmatpush1.bf16.msra.mxu0 0
        %1675 = vmatprep.subr.bf16.mxu0 0
        %1676 = vmatpush1.bf16.msra.mxu0 0
        %1677 = vmatprep.subr.bf16.mxu0 0
        %1678 = vmatpush1.bf16.msra.mxu0 0
        %1679 = vmatprep.subr.bf16.mxu0 0
        %1680 = vmatpush1.bf16.msra.mxu0 0
        %1681 = vmatprep.subr.bf16.mxu0 0
        %1682 = vmatpush1.bf16.msra.mxu0 0
        %1683 = vmatprep.subr.bf16.mxu0 0
        %1684 = vmatpush1.bf16.msra.mxu0 0
        %1685 = vmatprep.subr.bf16.mxu0 0
        %1686 = vmatpush1.bf16.msra.mxu0 0
        %1687 = vmatprep.subr.bf16.mxu0 0
        %1688 = vmatpush1.bf16.msra.mxu0 0
        %1689 = vmatprep.subr.bf16.mxu0 0
        %1690 = vmatpush1.bf16.msra.mxu0 0
        %1691 = vmatprep.subr.bf16.mxu0 0
        %1692 = vmatpush1.bf16.msra.mxu0 0
        %1693 = vmatprep.subr.bf16.mxu0 0
        %1694 = vmatpush1.bf16.msra.mxu0 0
        %1695 = vmatprep.subr.bf16.mxu0 0
        %1696 = vmatpush1.bf16.msra.mxu0 0
        %1697 = vmatprep.subr.bf16.mxu0 0
        %1698 = vmatpush1.bf16.msra.mxu0 0
        %1699 = vmatprep.subr.bf16.mxu0 0
        %1700 = vmatpush1.bf16.msra.mxu0 0
        %1701 = vmatprep.subr.bf16.mxu0 0
        %1702 = vmatpush1.bf16.msra.mxu0 0
        %1703 = vmatprep.mubr.bf16.mxu0 0
        %1704 = vmatmul.mubr.bf16.gmra.mrb[0].mxu0 %v1663
        %v1705 = vpop.f32.mrb[0].mxu0
        %v1706 = vadd.f32 0.0, %v1705
        %v1707 = vpop.f32.mrb[0].mxu0
        %v1708 = vpop.f32.mrb[0].mxu0
        %v1709 = vadd.f32 0.0, %v1708
        %v1710 = vpop.f32.mrb[0].mxu0
        %1711 = vmatprep.mubr.bf16.mxu0 0
        %1712 = vmatmul.mubr.bf16.gmra.mrb[0].mxu0 %v1666
        %v1713 = vpop.f32.mrb[0].mxu0
        %v1714 = vadd.f32 0.0, %v1713
        %v1715 = vpop.f32.mrb[0].mxu0
        %v1716 = vpop.f32.mrb[0].mxu0
        %v1717 = vadd.f32 0.0, %v1716
        %v1718 = vpop.f32.mrb[0].mxu0
        %1719 = vdwg.mxu0
        %v1720 = vadd.f32 %v1400, %v1706
        %v1721 = vadd.f32 %v1403, %v1709
        %v1722 = vadd.f32 %v1408, %v1714
        %v1723 = vadd.f32 %v1411, %v1717
        %1724 = vrot.lane.b32.xlu0 %v653, 104
        %v1725 = vpop.permute.xlu0 %1724
        %1726 = vrot.lane.b32.xlu0 %v727, 104
        %v1727 = vpop.permute.xlu0 %1726
        %v1729 = vsel %vm807, %v1725, 0
        %v1732 = vsel %vm807, %v1727, 0
        %1734 = vmatprep.subr.bf16.mxu0 0
        %1735 = vmatpush1.bf16.xpose.msra.mxu0 %v1732
        %1736 = vmatprep.subr.bf16.mxu0 0
        %1737 = vmatpush1.bf16.xpose.msra.mxu0 0
        %1738 = vmatprep.subr.bf16.mxu0 0
        %1739 = vmatpush1.bf16.xpose.msra.mxu0 0
        %1740 = vmatprep.subr.bf16.mxu0 0
        %1741 = vmatpush1.bf16.xpose.msra.mxu0 0
        %1742 = vmatprep.subr.bf16.mxu0 0
        %1743 = vmatpush1.bf16.xpose.msra.mxu0 0
        %1744 = vmatprep.subr.bf16.mxu0 0
        %1745 = vmatpush1.bf16.xpose.msra.mxu0 0
        %1746 = vmatprep.subr.bf16.mxu0 0
        %1747 = vmatpush1.bf16.xpose.msra.mxu0 0
        %1748 = vmatprep.subr.bf16.mxu0 0
        %1749 = vmatpush1.bf16.xpose.msra.mxu0 0
        %1750 = vmatprep.subr.bf16.mxu0 0
        %1751 = vmatpush1.bf16.xpose.msra.mxu0 0
        %1752 = vmatprep.subr.bf16.mxu0 0
        %1753 = vmatpush1.bf16.xpose.msra.mxu0 0
        %1754 = vmatprep.subr.bf16.mxu0 0
        %1755 = vmatpush1.bf16.xpose.msra.mxu0 0
        %1756 = vmatprep.subr.bf16.mxu0 0
        %1757 = vmatpush1.bf16.xpose.msra.mxu0 0
        %1758 = vmatprep.subr.bf16.mxu0 0
        %1759 = vmatpush1.bf16.xpose.msra.mxu0 0
        %1760 = vmatprep.subr.bf16.mxu0 0
        %1761 = vmatpush1.bf16.xpose.msra.mxu0 0
        %1762 = vmatprep.subr.bf16.mxu0 0
        %1763 = vmatpush1.bf16.xpose.msra.mxu0 0
        %1764 = vmatprep.subr.bf16.mxu0 0
        %1765 = vmatpush1.bf16.xpose.msra.mxu0 0
        %1766 = vmatprep.mubr.bf16.mxu0 0
        %1767 = vmatmul.mubr.bf16.gmra.mrb[0].mxu0 %v1729
        %v1768 = vpop.f32.mrb[0].mxu0
        %v1769 = vadd.f32 0.0, %v1768
        %v1770 = vpop.f32.mrb[0].mxu0
        %v1771 = vpop.f32.mrb[0].mxu0
        %v1772 = vadd.f32 0.0, %v1771
        %v1773 = vpop.f32.mrb[0].mxu0
        %1774 = vdwg.mxu0
        %1775 = vrot.lane.b32.xlu0 %v654, 104
        %v1776 = vpop.permute.xlu0 %1775
        %1777 = vrot.lane.b32.xlu0 %v728, 104
        %v1778 = vpop.permute.xlu0 %1777
        %v1780 = vsel %vm807, %v1776, 0
        %v1783 = vsel %vm807, %v1778, 0
        %1785 = vmatprep.subr.bf16.mxu0 0
        %1786 = vmatpush1.bf16.xpose.msra.mxu0 %v1783
        %1787 = vmatprep.subr.bf16.mxu0 0
        %1788 = vmatpush1.bf16.xpose.msra.mxu0 0
        %1789 = vmatprep.subr.bf16.mxu0 0
        %1790 = vmatpush1.bf16.xpose.msra.mxu0 0
        %1791 = vmatprep.subr.bf16.mxu0 0
        %1792 = vmatpush1.bf16.xpose.msra.mxu0 0
        %1793 = vmatprep.subr.bf16.mxu0 0
        %1794 = vmatpush1.bf16.xpose.msra.mxu0 0
        %1795 = vmatprep.subr.bf16.mxu0 0
        %1796 = vmatpush1.bf16.xpose.msra.mxu0 0
        %1797 = vmatprep.subr.bf16.mxu0 0
        %1798 = vmatpush1.bf16.xpose.msra.mxu0 0
        %1799 = vmatprep.subr.bf16.mxu0 0
        %1800 = vmatpush1.bf16.xpose.msra.mxu0 0
        %1801 = vmatprep.subr.bf16.mxu0 0
        %1802 = vmatpush1.bf16.xpose.msra.mxu0 0
        %1803 = vmatprep.subr.bf16.mxu0 0
        %1804 = vmatpush1.bf16.xpose.msra.mxu0 0
        %1805 = vmatprep.subr.bf16.mxu0 0
        %1806 = vmatpush1.bf16.xpose.msra.mxu0 0
        %1807 = vmatprep.subr.bf16.mxu0 0
        %1808 = vmatpush1.bf16.xpose.msra.mxu0 0
        %1809 = vmatprep.subr.bf16.mxu0 0
        %1810 = vmatpush1.bf16.xpose.msra.mxu0 0
        %1811 = vmatprep.subr.bf16.mxu0 0
        %1812 = vmatpush1.bf16.xpose.msra.mxu0 0
        %1813 = vmatprep.subr.bf16.mxu0 0
        %1814 = vmatpush1.bf16.xpose.msra.mxu0 0
        %1815 = vmatprep.subr.bf16.mxu0 0
        %1816 = vmatpush1.bf16.xpose.msra.mxu0 0
        %1817 = vmatprep.mubr.bf16.mxu0 0
        %1818 = vmatmul.mubr.bf16.gmra.mrb[0].mxu0 %v1780
        %v1819 = vpop.f32.mrb[0].mxu0
        %v1820 = vadd.f32 0.0, %v1819
        %v1821 = vpop.f32.mrb[0].mxu0
        %v1822 = vpop.f32.mrb[0].mxu0
        %v1823 = vadd.f32 0.0, %v1822
        %v1824 = vpop.f32.mrb[0].mxu0
        %1825 = vdwg.mxu0
        %v1826 = vmul.f32 %v1769, 0.35355338
        %v1827 = vmul.f32 %v1772, 0.35355338
        %v1828 = vmul.f32 %v1820, 0.35355338
        %v1829 = vmul.f32 %v1823, 0.35355338
        %v1830 = vsel %vm906, %v1826, -inf
        %1831 = vmax.xlane.f32.xlu0 %v1830
        %v1832 = vpop.xlane.xlu0 %1831
        %v1833 = vsel %vm906, %v1827, -inf
        %1834 = vmax.xlane.f32.xlu0 %v1833
        %v1835 = vpop.xlane.xlu0 %1834
        %v1836 = vsel %vm906, %v1828, -inf
        %1837 = vmax.xlane.f32.xlu0 %v1836
        %v1838 = vpop.xlane.xlu0 %1837
        %v1839 = vsel %vm906, %v1829, -inf
        %1840 = vmax.xlane.f32.xlu0 %v1839
        %v1841 = vpop.xlane.xlu0 %1840
        %v1842 = vsub.f32 %v1826, %v1832
        %v1843 = vsub.f32 %v1827, %v1835
        %v1844 = vsub.f32 %v1828, %v1838
        %v1845 = vsub.f32 %v1829, %v1841
        %v1846 = vmul.f32 %v1842, 1.442695
        %v1847 = vpow.pop %v1846
        %v1848 = vmul.f32 %v1843, 1.442695
        %v1849 = vpow.pop %v1848
        %v1850 = vmul.f32 %v1844, 1.442695
        %v1851 = vpow.pop %v1850
        %v1852 = vmul.f32 %v1845, 1.442695
        %v1853 = vpow.pop %v1852
        %v1854 = vsel %vm906, %v1847, 0.0
        %1855 = vadd.xlane.f32.xlu0 %v1854
        %v1856 = vpop.xlane.xlu0 %1855
        %v1857 = vsel %vm906, %v1849, 0.0
        %1858 = vadd.xlane.f32.xlu0 %v1857
        %v1859 = vpop.xlane.xlu0 %1858
        %v1860 = vsel %vm906, %v1851, 0.0
        %1861 = vadd.xlane.f32.xlu0 %v1860
        %v1862 = vpop.xlane.xlu0 %1861
        %v1863 = vsel %vm906, %v1853, 0.0
        %1864 = vadd.xlane.f32.xlu0 %v1863
        %v1865 = vpop.xlane.xlu0 %1864
        %v1866 = vrcp.pop %v1856
        %v1867 = vrcp.pop %v1859
        %v1868 = vrcp.pop %v1862
        %v1869 = vrcp.pop %v1865
        %v1870 = vmul.f32 %v1847, %v1866
        %v1871 = vmul.f32 %v1849, %v1867
        %v1872 = vmul.f32 %v1851, %v1868
        %v1873 = vmul.f32 %v1853, %v1869
        %v1874 = vpack.c.bf16 %v1871, %v1870
        %v1875 = vpack.c.bf16 %v1873, %v1872
        %1876 = vrot.lane.b32.xlu0 %v801, 104
        %v1877 = vpop.permute.xlu0 %1876
        %v1880 = vsel %vm906, %v1874, 0
        %1882 = vmatprep.subr.bf16.mxu0 0
        %1883 = vmatpush1.bf16.msra.mxu0 %v1877
        %1884 = vmatprep.subr.bf16.mxu0 0
        %1885 = vmatpush1.bf16.msra.mxu0 0
        %1886 = vmatprep.subr.bf16.mxu0 0
        %1887 = vmatpush1.bf16.msra.mxu0 0
        %1888 = vmatprep.subr.bf16.mxu0 0
        %1889 = vmatpush1.bf16.msra.mxu0 0
        %1890 = vmatprep.subr.bf16.mxu0 0
        %1891 = vmatpush1.bf16.msra.mxu0 0
        %1892 = vmatprep.subr.bf16.mxu0 0
        %1893 = vmatpush1.bf16.msra.mxu0 0
        %1894 = vmatprep.subr.bf16.mxu0 0
        %1895 = vmatpush1.bf16.msra.mxu0 0
        %1896 = vmatprep.subr.bf16.mxu0 0
        %1897 = vmatpush1.bf16.msra.mxu0 0
        %1898 = vmatprep.subr.bf16.mxu0 0
        %1899 = vmatpush1.bf16.msra.mxu0 0
        %1900 = vmatprep.subr.bf16.mxu0 0
        %1901 = vmatpush1.bf16.msra.mxu0 0
        %1902 = vmatprep.subr.bf16.mxu0 0
        %1903 = vmatpush1.bf16.msra.mxu0 0
        %1904 = vmatprep.subr.bf16.mxu0 0
        %1905 = vmatpush1.bf16.msra.mxu0 0
        %1906 = vmatprep.subr.bf16.mxu0 0
        %1907 = vmatpush1.bf16.msra.mxu0 0
        %1908 = vmatprep.subr.bf16.mxu0 0
        %1909 = vmatpush1.bf16.msra.mxu0 0
        %1910 = vmatprep.subr.bf16.mxu0 0
        %1911 = vmatpush1.bf16.msra.mxu0 0
        %1912 = vmatprep.subr.bf16.mxu0 0
        %1913 = vmatpush1.bf16.msra.mxu0 0
        %1914 = vmatprep.mubr.bf16.mxu0 0
        %1915 = vmatmul.mubr.bf16.gmra.mrb[0].mxu0 %v1880
        %v1916 = vpop.f32.mrb[0].mxu0
        %v1917 = vadd.f32 0.0, %v1916
        %v1918 = vpop.f32.mrb[0].mxu0
        %v1919 = vpop.f32.mrb[0].mxu0
        %v1920 = vadd.f32 0.0, %v1919
        %v1921 = vpop.f32.mrb[0].mxu0
        %1922 = vdwg.mxu0
        %1923 = vrot.lane.b32.xlu0 %v802, 104
        %v1924 = vpop.permute.xlu0 %1923
        %v1927 = vsel %vm906, %v1875, 0
        %1929 = vmatprep.subr.bf16.mxu0 0
        %1930 = vmatpush1.bf16.msra.mxu0 %v1924
        %1931 = vmatprep.subr.bf16.mxu0 0
        %1932 = vmatpush1.bf16.msra.mxu0 0
        %1933 = vmatprep.subr.bf16.mxu0 0
        %1934 = vmatpush1.bf16.msra.mxu0 0
        %1935 = vmatprep.subr.bf16.mxu0 0
        %1936 = vmatpush1.bf16.msra.mxu0 0
        %1937 = vmatprep.subr.bf16.mxu0 0
        %1938 = vmatpush1.bf16.msra.mxu0 0
        %1939 = vmatprep.subr.bf16.mxu0 0
        %1940 = vmatpush1.bf16.msra.mxu0 0
        %1941 = vmatprep.subr.bf16.mxu0 0
        %1942 = vmatpush1.bf16.msra.mxu0 0
        %1943 = vmatprep.subr.bf16.mxu0 0
        %1944 = vmatpush1.bf16.msra.mxu0 0
        %1945 = vmatprep.subr.bf16.mxu0 0
        %1946 = vmatpush1.bf16.msra.mxu0 0
        %1947 = vmatprep.subr.bf16.mxu0 0
        %1948 = vmatpush1.bf16.msra.mxu0 0
        %1949 = vmatprep.subr.bf16.mxu0 0
        %1950 = vmatpush1.bf16.msra.mxu0 0
        %1951 = vmatprep.subr.bf16.mxu0 0
        %1952 = vmatpush1.bf16.msra.mxu0 0
        %1953 = vmatprep.subr.bf16.mxu0 0
        %1954 = vmatpush1.bf16.msra.mxu0 0
        %1955 = vmatprep.subr.bf16.mxu0 0
        %1956 = vmatpush1.bf16.msra.mxu0 0
        %1957 = vmatprep.subr.bf16.mxu0 0
        %1958 = vmatpush1.bf16.msra.mxu0 0
        %1959 = vmatprep.subr.bf16.mxu0 0
        %1960 = vmatpush1.bf16.msra.mxu0 0
        %1961 = vmatprep.mubr.bf16.mxu0 0
        %1962 = vmatmul.mubr.bf16.gmra.mrb[0].mxu0 %v1927
        %v1963 = vpop.f32.mrb[0].mxu0
        %v1964 = vadd.f32 0.0, %v1963
        %v1965 = vpop.f32.mrb[0].mxu0
        %v1966 = vpop.f32.mrb[0].mxu0
        %v1967 = vadd.f32 0.0, %v1966
        %v1968 = vpop.f32.mrb[0].mxu0
        %1969 = vdwg.mxu0
        %v1970 = vpack.c.bf16 %v1920, %v1917
        %v1971 = vpack.c.bf16 %v1967, %v1964
        %v1973 = vsel %vm807, %v1970, 0
        %v1976 = vsel %vm807, %v1971, 0
        %v1979 = vsel %vm1303, %v806, 0
        %1981 = vmatprep.subr.bf16.mxu0 0
        %1982 = vmatpush1.bf16.msra.mxu0 %v1979
        %1983 = vmatprep.subr.bf16.mxu0 0
        %1984 = vmatpush1.bf16.msra.mxu0 0
        %1985 = vmatprep.subr.bf16.mxu0 0
        %1986 = vmatpush1.bf16.msra.mxu0 0
        %1987 = vmatprep.subr.bf16.mxu0 0
        %1988 = vmatpush1.bf16.msra.mxu0 0
        %1989 = vmatprep.subr.bf16.mxu0 0
        %1990 = vmatpush1.bf16.msra.mxu0 0
        %1991 = vmatprep.subr.bf16.mxu0 0
        %1992 = vmatpush1.bf16.msra.mxu0 0
        %1993 = vmatprep.subr.bf16.mxu0 0
        %1994 = vmatpush1.bf16.msra.mxu0 0
        %1995 = vmatprep.subr.bf16.mxu0 0
        %1996 = vmatpush1.bf16.msra.mxu0 0
        %1997 = vmatprep.subr.bf16.mxu0 0
        %1998 = vmatpush1.bf16.msra.mxu0 0
        %1999 = vmatprep.subr.bf16.mxu0 0
        %2000 = vmatpush1.bf16.msra.mxu0 0
        %2001 = vmatprep.subr.bf16.mxu0 0
        %2002 = vmatpush1.bf16.msra.mxu0 0
        %2003 = vmatprep.subr.bf16.mxu0 0
        %2004 = vmatpush1.bf16.msra.mxu0 0
        %2005 = vmatprep.subr.bf16.mxu0 0
        %2006 = vmatpush1.bf16.msra.mxu0 0
        %2007 = vmatprep.subr.bf16.mxu0 0
        %2008 = vmatpush1.bf16.msra.mxu0 0
        %2009 = vmatprep.subr.bf16.mxu0 0
        %2010 = vmatpush1.bf16.msra.mxu0 0
        %2011 = vmatprep.subr.bf16.mxu0 0
        %2012 = vmatpush1.bf16.msra.mxu0 0
        %2013 = vmatprep.mubr.bf16.mxu0 0
        %2014 = vmatmul.mubr.bf16.gmra.mrb[0].mxu0 %v1973
        %v2015 = vpop.f32.mrb[0].mxu0
        %v2016 = vadd.f32 0.0, %v2015
        %v2017 = vpop.f32.mrb[0].mxu0
        %v2018 = vpop.f32.mrb[0].mxu0
        %v2019 = vadd.f32 0.0, %v2018
        %v2020 = vpop.f32.mrb[0].mxu0
        %2021 = vmatprep.mubr.bf16.mxu0 0
        %2022 = vmatmul.mubr.bf16.gmra.mrb[0].mxu0 %v1976
        %v2023 = vpop.f32.mrb[0].mxu0
        %v2024 = vadd.f32 0.0, %v2023
        %v2025 = vpop.f32.mrb[0].mxu0
        %v2026 = vpop.f32.mrb[0].mxu0
        %v2027 = vadd.f32 0.0, %v2026
        %v2028 = vpop.f32.mrb[0].mxu0
        %2029 = vdwg.mxu0
        %v2030 = vadd.f32 %v1720, %v2016
        %v2031 = vadd.f32 %v1721, %v2019
        %v2032 = vadd.f32 %v1722, %v2024
        %v2033 = vadd.f32 %v1723, %v2027
        %v2034 = vadd.f32 %v515, %v2030
        %v2035 = vadd.f32 %v516, %v2031
        %v2036 = vadd.f32 %v517, %v2032
        %v2037 = vadd.f32 %v518, %v2033
        %v2038 = vld [vmem:[#allocation10] sm:$0x1]
        %v2040 = vlaneseq
        %v2041 = vshrl.u32 %v2040, 7
        %v2042 = vsub.s32 0, %v2041
        %v2043 = vrot.slane %v2038, %v2042
        %v2045 = vadd.f32 %v2034, %v2043
        %v2046 = vadd.f32 %v2035, %v2043
        %v2047 = vadd.f32 %v2036, %v2043
        %v2048 = vadd.f32 %v2037, %v2043
        %v2049 = vsel %vm519, %v2045, 0.0
        %2050 = vadd.xlane.f32.xlu0 %v2049
        %v2051 = vpop.xlane.xlu0 %2050
        %v2052 = vsel %vm519, %v2046, 0.0
        %2053 = vadd.xlane.f32.xlu0 %v2052
        %v2054 = vpop.xlane.xlu0 %2053
        %v2055 = vsel %vm519, %v2047, 0.0
        %2056 = vadd.xlane.f32.xlu0 %v2055
        %v2057 = vpop.xlane.xlu0 %2056
        %v2058 = vsel %vm519, %v2048, 0.0
        %2059 = vadd.xlane.f32.xlu0 %v2058
        %v2060 = vpop.xlane.xlu0 %2059
        %v2061 = vmul.f32 %v2051, %v532
        %v2062 = vmul.f32 %v2054, %v532
        %v2063 = vmul.f32 %v2057, %v532
        %v2064 = vmul.f32 %v2060, %v532
        %v2065 = vsub.f32 %v2045, %v2061
        %v2066 = vsub.f32 %v2046, %v2062
        %v2067 = vsub.f32 %v2047, %v2063
        %v2068 = vsub.f32 %v2048, %v2064
        %v2069 = vmul.f32 %v2065, %v2065
        %v2070 = vmul.f32 %v2066, %v2066
        %v2071 = vmul.f32 %v2067, %v2067
        %v2072 = vmul.f32 %v2068, %v2068
        %v2073 = vsel %vm519, %v2069, 0.0
        %2074 = vadd.xlane.f32.xlu0 %v2073
        %v2075 = vpop.xlane.xlu0 %2074
        %v2076 = vsel %vm519, %v2070, 0.0
        %2077 = vadd.xlane.f32.xlu0 %v2076
        %v2078 = vpop.xlane.xlu0 %2077
        %v2079 = vsel %vm519, %v2071, 0.0
        %2080 = vadd.xlane.f32.xlu0 %v2079
        %v2081 = vpop.xlane.xlu0 %2080
        %v2082 = vsel %vm519, %v2072, 0.0
        %2083 = vadd.xlane.f32.xlu0 %v2082
        %v2084 = vpop.xlane.xlu0 %2083
        %v2085 = vmul.f32 %v2075, %v532
        %v2086 = vmul.f32 %v2078, %v532
        %v2087 = vmul.f32 %v2081, %v532
        %v2088 = vmul.f32 %v2084, %v532
        %v2089 = vadd.f32 %v2085, 1e-05
        %v2090 = vadd.f32 %v2086, 1e-05
        %v2091 = vadd.f32 %v2087, 1e-05
        %v2092 = vadd.f32 %v2088, 1e-05
        %v2093 = vrsqrt.pop %v2089
        %v2094 = vrsqrt.pop %v2090
        %v2095 = vrsqrt.pop %v2091
        %v2096 = vrsqrt.pop %v2092
        %v2097 = vmul.f32 %v2065, %v2093
        %v2098 = vmul.f32 %v2066, %v2094
        %v2099 = vmul.f32 %v2067, %v2095
        %v2100 = vmul.f32 %v2068, %v2096
        %v2101 = vpack.c.bf16 %v2098, %v2097
        %v2102 = vpack.c.bf16 %v2100, %v2099
        %v2103 = vld [vmem:[%s9] sm:$0xf]
        %v2104 = vld [vmem:[%s9 + $0x4] sm:$0xf]
        %v2105 = vld [vmem:[%s9 + $0x8] sm:$0xf]
        %v2106 = vld [vmem:[%s9 + $0xc] sm:$0xf]
        %v2107 = vld [vmem:[%s10] sm:$0x1]
        %v2109 = vlaneseq
        %v2110 = vshrl.u32 %v2109, 7
        %v2111 = vsub.s32 0, %v2110
        %v2112 = vrot.slane %v2107, %v2111
        %v2118 = vunpack.c.l.b16 %v2103
        %v2119 = vunpack.c.l.b16 %v2104
        %v2120 = vunpack.c.l.b16 %v2105
        %v2121 = vunpack.c.l.b16 %v2106
        %v2122 = vpack.c.b16 %v2119, %v2118
        %v2123 = vpack.c.b16 %v2121, %v2120
        %v2127 = vsel %vm519, %v2101, 0
        %v2130 = vsel %vm519, %v2102, 0
        %2132 = vmatprep.subr.bf16.mxu0 0
        %2133 = vmatpush1.bf16.msra.mxu0 %v2122
        %2134 = vmatprep.subr.bf16.mxu0 0
        %2135 = vmatpush1.bf16.msra.mxu0 %v2123
        %2136 = vmatprep.subr.bf16.mxu0 0
        %2137 = vmatpush1.bf16.msra.mxu0 0
        %2138 = vmatprep.subr.bf16.mxu0 0
        %2139 = vmatpush1.bf16.msra.mxu0 0
        %2140 = vmatprep.subr.bf16.mxu0 0
        %2141 = vmatpush1.bf16.msra.mxu0 0
        %2142 = vmatprep.subr.bf16.mxu0 0
        %2143 = vmatpush1.bf16.msra.mxu0 0
        %2144 = vmatprep.subr.bf16.mxu0 0
        %2145 = vmatpush1.bf16.msra.mxu0 0
        %2146 = vmatprep.subr.bf16.mxu0 0
        %2147 = vmatpush1.bf16.msra.mxu0 0
        %2148 = vmatprep.subr.bf16.mxu0 0
        %2149 = vmatpush1.bf16.msra.mxu0 0
        %2150 = vmatprep.subr.bf16.mxu0 0
        %2151 = vmatpush1.bf16.msra.mxu0 0
        %2152 = vmatprep.subr.bf16.mxu0 0
        %2153 = vmatpush1.bf16.msra.mxu0 0
        %2154 = vmatprep.subr.bf16.mxu0 0
        %2155 = vmatpush1.bf16.msra.mxu0 0
        %2156 = vmatprep.subr.bf16.mxu0 0
        %2157 = vmatpush1.bf16.msra.mxu0 0
        %2158 = vmatprep.subr.bf16.mxu0 0
        %2159 = vmatpush1.bf16.msra.mxu0 0
        %2160 = vmatprep.subr.bf16.mxu0 0
        %2161 = vmatpush1.bf16.msra.mxu0 0
        %2162 = vmatprep.subr.bf16.mxu0 0
        %2163 = vmatpush1.bf16.msra.mxu0 0
        %2164 = vmatprep.mubr.bf16.mxu0 0
        %2165 = vmatmul.mubr.bf16.gmra.mrb[0].mxu0 %v2127
        %v2166 = vpop.f32.mrb[0].mxu0
        %v2167 = vadd.f32 %v2112, %v2166
        %v2168 = vpop.f32.mrb[0].mxu0
        %v2169 = vpop.f32.mrb[0].mxu0
        %v2170 = vadd.f32 %v2112, %v2169
        %v2171 = vpop.f32.mrb[0].mxu0
        %2172 = vmatprep.mubr.bf16.mxu0 0
        %2173 = vmatmul.mubr.bf16.gmra.mrb[0].mxu0 %v2130
        %v2174 = vpop.f32.mrb[0].mxu0
        %v2175 = vadd.f32 %v2112, %v2174
        %v2176 = vpop.f32.mrb[0].mxu0
        %v2177 = vpop.f32.mrb[0].mxu0
        %v2178 = vadd.f32 %v2112, %v2177
        %v2179 = vpop.f32.mrb[0].mxu0
        %2180 = vdwg.mxu0
        %v2181 = vmax.f32 %v2167, 0.0
        %v2182 = vmax.f32 %v2170, 0.0
        %v2183 = vmax.f32 %v2175, 0.0
        %v2184 = vmax.f32 %v2178, 0.0
        %v2185 = vpack.c.bf16 %v2182, %v2181
        %v2186 = vpack.c.bf16 %v2184, %v2183
        %v2187 = vld [vmem:[%s11] sm:$0xf]
        %v2188 = vld [vmem:[%s11 + $0x4] sm:$0xf]
        %v2189 = vld [vmem:[%s11 + $0x8] sm:$0xf]
        %v2190 = vld [vmem:[%s11 + $0xc] sm:$0xf]
        %v2191 = vld [vmem:[%s11 + $0x10] sm:$0xf]
        %v2192 = vld [vmem:[%s11 + $0x14] sm:$0xf]
        %v2193 = vld [vmem:[%s11 + $0x18] sm:$0xf]
        %v2194 = vld [vmem:[%s11 + $0x1c] sm:$0xf]
        %v2195 = vld [vmem:[%s11 + $0x20] sm:$0xf]
        %v2196 = vld [vmem:[%s11 + $0x24] sm:$0xf]
        %v2197 = vld [vmem:[%s11 + $0x28] sm:$0xf]
        %v2198 = vld [vmem:[%s11 + $0x2c] sm:$0xf]
        %v2199 = vld [vmem:[%s11 + $0x30] sm:$0xf]
        %v2200 = vld [vmem:[%s11 + $0x34] sm:$0xf]
        %v2201 = vld [vmem:[%s11 + $0x38] sm:$0xf]
        %v2202 = vld [vmem:[%s11 + $0x3c] sm:$0xf]
        %v2203 = vld [vmem:[%s12] sm:$0x1]
        %v2205 = vlaneseq
        %v2206 = vshrl.u32 %v2205, 7
        %v2207 = vsub.s32 0, %v2206
        %v2208 = vrot.slane %v2203, %v2207
        %v2226 = vunpack.c.l.b16 %v2187
        %v2227 = vunpack.c.l.b16 %v2188
        %v2228 = vunpack.c.l.b16 %v2189
        %v2229 = vunpack.c.l.b16 %v2190
        %v2230 = vunpack.c.l.b16 %v2191
        %v2231 = vunpack.c.l.b16 %v2192
        %v2232 = vunpack.c.l.b16 %v2193
        %v2233 = vunpack.c.l.b16 %v2194
        %v2234 = vunpack.c.l.b16 %v2195
        %v2235 = vunpack.c.l.b16 %v2196
        %v2236 = vunpack.c.l.b16 %v2197
        %v2237 = vunpack.c.l.b16 %v2198
        %v2238 = vunpack.c.l.b16 %v2199
        %v2239 = vunpack.c.l.b16 %v2200
        %v2240 = vunpack.c.l.b16 %v2201
        %v2241 = vunpack.c.l.b16 %v2202
        %v2242 = vpack.c.b16 %v2227, %v2226
        %v2243 = vpack.c.b16 %v2229, %v2228
        %v2244 = vpack.c.b16 %v2231, %v2230
        %v2245 = vpack.c.b16 %v2233, %v2232
        %v2246 = vpack.c.b16 %v2235, %v2234
        %v2247 = vpack.c.b16 %v2237, %v2236
        %v2248 = vpack.c.b16 %v2239, %v2238
        %v2249 = vpack.c.b16 %v2241, %v2240
        %2258 = vmatprep.subr.bf16.mxu0 0
        %2259 = vmatpush1.bf16.msra.mxu0 %v2242
        %2260 = vmatprep.subr.bf16.mxu0 0
        %2261 = vmatpush1.bf16.msra.mxu0 %v2243
        %2262 = vmatprep.subr.bf16.mxu0 0
        %2263 = vmatpush1.bf16.msra.mxu0 %v2244
        %2264 = vmatprep.subr.bf16.mxu0 0
        %2265 = vmatpush1.bf16.msra.mxu0 %v2245
        %2266 = vmatprep.subr.bf16.mxu0 0
        %2267 = vmatpush1.bf16.msra.mxu0 %v2246
        %2268 = vmatprep.subr.bf16.mxu0 0
        %2269 = vmatpush1.bf16.msra.mxu0 %v2247
        %2270 = vmatprep.subr.bf16.mxu0 0
        %2271 = vmatpush1.bf16.msra.mxu0 %v2248
        %2272 = vmatprep.subr.bf16.mxu0 0
        %2273 = vmatpush1.bf16.msra.mxu0 %v2249
        %2274 = vmatprep.subr.bf16.mxu0 0
        %2275 = vmatpush1.bf16.msra.mxu0 0
        %2276 = vmatprep.subr.bf16.mxu0 0
        %2277 = vmatpush1.bf16.msra.mxu0 0
        %2278 = vmatprep.subr.bf16.mxu0 0
        %2279 = vmatpush1.bf16.msra.mxu0 0
        %2280 = vmatprep.subr.bf16.mxu0 0
        %2281 = vmatpush1.bf16.msra.mxu0 0
        %2282 = vmatprep.subr.bf16.mxu0 0
        %2283 = vmatpush1.bf16.msra.mxu0 0
        %2284 = vmatprep.subr.bf16.mxu0 0
        %2285 = vmatpush1.bf16.msra.mxu0 0
        %2286 = vmatprep.subr.bf16.mxu0 0
        %2287 = vmatpush1.bf16.msra.mxu0 0
        %2288 = vmatprep.subr.bf16.mxu0 0
        %2289 = vmatpush1.bf16.msra.mxu0 0
        %2290 = vmatprep.mubr.bf16.mxu0 0
        %2291 = vmatmul.mubr.bf16.gmra.mrb[0].mxu0 %v2185
        %v2292 = vpop.f32.mrb[0].mxu0
        %v2293 = vadd.f32 %v2208, %v2292
        %v2294 = vpop.f32.mrb[0].mxu0
        %v2295 = vpop.f32.mrb[0].mxu0
        %v2296 = vadd.f32 %v2208, %v2295
        %v2297 = vpop.f32.mrb[0].mxu0
        %2298 = vmatprep.mubr.bf16.mxu0 0
        %2299 = vmatmul.mubr.bf16.gmra.mrb[0].mxu0 %v2186
        %v2300 = vpop.f32.mrb[0].mxu0
        %v2301 = vadd.f32 %v2208, %v2300
        %v2302 = vpop.f32.mrb[0].mxu0
        %v2303 = vpop.f32.mrb[0].mxu0
        %v2304 = vadd.f32 %v2208, %v2303
        %v2305 = vpop.f32.mrb[0].mxu0
        %2306 = vdwg.mxu0
        %v2307 = vadd.f32 %v2045, %v2293
        %v2308 = vadd.f32 %v2046, %v2296
        %v2309 = vadd.f32 %v2047, %v2301
        %v2310 = vadd.f32 %v2048, %v2304
        %2311 = vst.msk [vmem:[%s505] sm:$0xff] %vm519, %v2307
        %2312 = vst.msk [vmem:[%s505 + $0x8] sm:$0xff] %vm519, %v2308
        %2313 = vst.msk [vmem:[%s505 + $0x10] sm:$0xff] %vm519, %v2309
        %2314 = vst.msk [vmem:[%s505 + $0x18] sm:$0xff] %vm519, %v2310
        %s2315 = sand.u32 %s316, 1
        %s2316 = scalar_lea.sflag [#allocation4], %s2315
        %s2317 = sand.u32 %s316, 1
        %s2318 = smul.addr %s2317, 32
        %s2319 = scalar_lea.vmem [#allocation11], %s2318
        // Predicated region
        $region93: #{tpu_custom_call.1} parent=71 // pred_check
          %p2320 = pneg %p326
        $region94: #{tpu_custom_call.1} parent=71 // pred_check_branch
          %2322 = sbr.rel (%p2320) target = $region96
        $region95: #{tpu_custom_call.1} parent=71 // pred_region
          %s2323 = smul.u32 2, %s30
          %s2325 = ssub.s32 512, 512
          %2326 = vsyncadd %s2316, %s2325
          %s2327 = smul.addr %s2323, 2
          %s2328 = smul.addr %s2327, 128
          %s2329 = scalar_lea.hbm %s13, %s2328
          %s2330 = sshll.u32 %s2319, 4
          %s2331 = int_to_ptr.vmem [resolvable:$true] %s2330
          %2336 = dma.vmem_to_hbm [thread:$0]  %s2331, 512, %s2329, %s2316, 128, 128, 8
        $region96: #{tpu_custom_call.1} parent=71 // pred_fallthru
          _
      $region72: #{tpu_custom_call.1} parent=5 // pred_fallthru
        _
      %p2337 = scmp.le.s32.totalorder 2, %s25
      // Predicated region
      $region97: #{tpu_custom_call.1} parent=5 // pred_check
        %p2338 = pneg %p2337
      $region98: #{tpu_custom_call.1} parent=5 // pred_check_branch
        %2340 = sbr.rel (%p2338) target = $region100
      $region99: #{tpu_custom_call.1} parent=5 // pred_region
        %s2341 = ssub.s32 %s25, 2
        // Predicated region
        $region101: #{tpu_custom_call.1} parent=99 // pred_check
          %p2342 = pneg %p332
        $region102: #{tpu_custom_call.1} parent=99 // pred_check_branch
          %2344 = sbr.rel (%p2342) target = $region104
        $region103: #{tpu_custom_call.1} parent=99 // pred_region
          %s2345 = sand.u32 %s317, 1
          %s2346 = scalar_lea.sflag [#allocation4], %s2345
          %s2347 = sand.u32 %s317, 1
          %s2348 = smul.addr %s2347, 32
          %s2349 = scalar_lea.vmem [#allocation11], %s2348
          %2350 = dma.done %s2346, 512
        $region104: #{tpu_custom_call.1} parent=99 // pred_fallthru
          _
      $region100: #{tpu_custom_call.1} parent=5 // pred_fallthru
        _
    $region6: #{tpu_custom_call.1} parent=1 // loop_footer
      %s29 = sadd.s32 1, %s25
    $region7: #{tpu_custom_call.1} parent=1 // loop_footer_branch
      %24 = sbr.rel target = $region3
    $region8: #{tpu_custom_call.1} parent=1 // loop_exit
      _
    %2351 = vsyncpa [#allocation3], 1
    %s2352 = scalar_lea.sflag [#allocation3], 1
    %2353 = vsyncpa %s2352, 1
    %2354 = vsyncpa [#allocation6], 1
    %2355 = vsyncpa [#allocation9], 1
    %2356 = vsyncpa [#allocation4], 1
    %s2357 = scalar_lea.sflag [#allocation4], 1
    %2358 = vsyncpa %s2357, 1

</llo_original>
